<compile_context>
chip_gen: v7x
topology: tpu7x:2x2x1
jax: 0.10.0
libtpu: 0.0.40
codegen_flags: <defaults>
</compile_context>

<pallas_src>
import math

import jax
import jax.numpy as jnp
from jax.experimental import pallas as pl
from jax.experimental.pallas import tpu as pltpu

# ----- small, self-consistent Gemma config -----
B, S, H = 2, 8, 64          # batch, seq, hidden_size
NH, NKV, DH = 4, 2, 16      # num_attention_heads, num_key_value_heads, head_dim
GROUP = NH // NKV
QD, KD = NH * DH, NKV * DH  # packed Q width (64), packed K/V width (32)
R = B * S                   # flattened token count (16)
INTER = 128                 # intermediate_size
EPS = 1e-6                  # rms_norm_eps
ROPE_THETA = 10000.0
NEG_INF = -1e9

# lane offsets inside the fused projection output (R, 5*QD = 320)
_Q, _K, _V, _QR, _KR = 0, QD, 2 * QD, 3 * QD, 4 * QD

# lane offsets inside the packed constants slab (R, 4*QD = 256)
_COS, _SIN, _NRM, _MSK = 0, QD, 2 * QD, 3 * QD


# ---------------- in-kernel helpers ----------------
def _rms_norm(x, w, eps):
    # x: (R, H) fp32 ; w: (1, H) fp32 — Gemma: x * rsqrt(mean(x^2)+eps) * (1+w)
    var = jnp.mean(x * x, axis=-1, keepdims=True)
    return x * jax.lax.rsqrt(var + eps) * (1.0 + w)


def _gelu_tanh(x):
    c = math.sqrt(2.0 / math.pi)
    return 0.5 * x * (1.0 + jnp.tanh(c * (x + 0.044715 * x * x * x)))


# ---------------- fused decoder-layer kernel ----------------
def decoder_kernel(x_ref, wbig_ref, wo_ref, wgu_ref, wd_ref, consts_ref,
                   out_ref, ctx_ref):
    x = x_ref[...].astype(jnp.float32)                 # (R, H) fp32 residual
    consts = consts_ref[...]                           # (R, 256) fp32 slab
    cos = consts[:, _COS:_COS + QD]                    # (R, QD)
    sin = consts[:, _SIN:_SIN + QD]                    # (R, QD)
    w_in = consts[0:1, _NRM:_NRM + H]                  # (1, H)
    w_post = consts[1:2, _NRM:_NRM + H]                # (1, H)
    mask = consts[0:S, _MSK:_MSK + S]                  # (S, S) additive causal

    # ---------- attention block ----------
    xn = _rms_norm(x, w_in, EPS)                       # fp32

    # Single fused projection: q | k(expanded) | v(expanded) | rot(q) | rot(k)
    p = jnp.dot(xn.astype(jnp.bfloat16), wbig_ref[...],
                preferred_element_type=jnp.float32)    # (R, 320) fp32

    # RoPE combine in fp32 (rotation + GQA expansion + 1/sqrt(d) already folded
    # into the weights).
    q = p[:, _Q:_Q + QD] * cos + p[:, _QR:_QR + QD] * sin   # (R, QD)
    k = p[:, _K:_K + QD] * cos + p[:, _KR:_KR + QD] * sin   # (R, QD)
    v = p[:, _V:_V + QD]                                     # (R, QD)

    q3 = q.reshape(B, S, QD)
    k3 = k.reshape(B, S, QD)
    v3 = v.reshape(B, S, QD)

    # Static head loop, batched over batch via 3-D einsums.  Context for every
    # head is packed into lane slices of a (R, QD) scratch -> one o_proj matmul.
    for h in range(NH):
        sl = slice(h * DH, (h + 1) * DH)
        qh = q3[:, :, sl].astype(jnp.bfloat16)          # (B, S, DH)
        kh = k3[:, :, sl].astype(jnp.bfloat16)
        s = jnp.einsum("bqd,bkd->bqk", qh, kh,
                       preferred_element_type=jnp.float32)   # (B, S, S) fp32
        s = s + mask[None]
        s = s - jnp.max(s, axis=-1, keepdims=True)
        pr = jnp.exp(s)
        # approx reciprocal (EUP slot); fine for inference tolerances.
        pr = pr * pl.reciprocal(jnp.sum(pr, axis=-1, keepdims=True), approx=True)
        vh = v3[:, :, sl].astype(jnp.bfloat16)
        ctx = jnp.einsum("bqk,bkd->bqd", pr.astype(jnp.bfloat16), vh,
                         preferred_element_type=jnp.float32)  # (B, S, DH)
        ctx_ref[:, sl] = ctx.reshape(R, DH)

    o = jnp.dot(ctx_ref[...].astype(jnp.bfloat16), wo_ref[...],
                preferred_element_type=jnp.float32)     # (R, H)
    h1 = x + o                                          # first residual add

    # ---------- MLP block ----------
    xn2 = _rms_norm(h1, w_post, EPS)
    gu = jnp.dot(xn2.astype(jnp.bfloat16), wgu_ref[...],
                 preferred_element_type=jnp.float32)    # (R, 2*INTER)
    mid = _gelu_tanh(gu[:, :INTER]) * gu[:, INTER:]     # fp32
    d = jnp.dot(mid.astype(jnp.bfloat16), wd_ref[...],
                preferred_element_type=jnp.float32)     # (R, H)

    out_ref[...] = (h1 + d).astype(out_ref.dtype)       # second residual add


# ---------------- one-time weight / constant fusion ----------------
def prepare_layer(params, cos, sin, mask):
    w_in, wq, wk, wv, wo, w_post, wg, wu, wd = params
    f32 = jnp.float32

    # rotate_half as a right-multiplication per head: x @ rot == [-x2, x1]
    half = DH // 2
    rot = jnp.zeros((DH, DH), f32)
    rot = rot.at[:half, half:].set(jnp.eye(half, dtype=f32))
    rot = rot.at[half:, :half].set(-jnp.eye(half, dtype=f32))
    rotq = jnp.kron(jnp.eye(NH, dtype=f32), rot)               # (QD, QD)

    # GQA expansion (KD -> QD): query head h reads KV head h // GROUP
    expand = jnp.kron(jnp.kron(jnp.eye(NKV, dtype=f32),
                               jnp.ones((1, GROUP), f32)),
                      jnp.eye(DH, dtype=f32))                  # (KD, QD)

    scale = 1.0 / math.sqrt(DH)
    wq_s = wq * scale                                          # fold softmax scale
    wk_e = wk @ expand
    wv_e = wv @ expand
    w_big = jnp.concatenate(
        [wq_s, wk_e, wv_e, wq_s @ rotq, wk_e @ rotq], axis=1)  # (H, 320)

    wgu = jnp.concatenate([wg, wu], axis=1)                    # (H, 2*INTER)

    # packed constants slab: [cos | sin | (w_in; w_post) | mask]
    consts = jnp.zeros((R, 4 * QD), f32)
    consts = consts.at[:, _COS:_COS + QD].set(jnp.tile(cos, (B, NH)))
    consts = consts.at[:, _SIN:_SIN + QD].set(jnp.tile(sin, (B, NH)))
    consts = consts.at[0, _NRM:_NRM + H].set(w_in[0])
    consts = consts.at[1, _NRM:_NRM + H].set(w_post[0])
    consts = consts.at[:S, _MSK:_MSK + S].set(mask)

    bf = jnp.bfloat16
    return (w_big.astype(bf), wo.astype(bf), wgu.astype(bf), wd.astype(bf),
            consts)


# ---------------- wrapper ----------------
@jax.jit
def gemma_decoder_layer(x, prepared):
    w_big, wo_b, wgu_b, wd_b, consts = prepared
    vmem = pl.BlockSpec(memory_space=pltpu.MemorySpace.VMEM)
    out = pl.pallas_call(
        decoder_kernel,
        out_shape=jax.ShapeDtypeStruct((R, H), x.dtype),
        in_specs=[vmem] * 6,
        out_specs=vmem,
        scratch_shapes=[pltpu.VMEM((R, QD), jnp.float32)],   # packed per-head ctx
    )(x.reshape(R, H), w_big, wo_b, wgu_b, wd_b, consts)
    return out.reshape(B, S, H)


# ---------------- pure-JAX reference (mirrors PyTorch semantics, fp32) ----------------
def reference(x, params, cos, sin, mask):
    w_in, wq, wk, wv, wo, w_post, wg, wu, wd = params
    x = x.astype(jnp.float32)

    def rms(v, w):
        var = jnp.mean(v * v, axis=-1, keepdims=True)
        return v * jax.lax.rsqrt(var + EPS) * (1.0 + w[0])

    # attention block
    res = x
    xn = rms(x, w_in)
    q = (xn @ wq).reshape(B, S, NH, DH).transpose(0, 2, 1, 3)
    k = (xn @ wk).reshape(B, S, NKV, DH).transpose(0, 2, 1, 3)
    v = (xn @ wv).reshape(B, S, NKV, DH).transpose(0, 2, 1, 3)

    def rope(t):
        d = t.shape[-1]
        rh = jnp.concatenate([-t[..., d // 2:], t[..., : d // 2]], axis=-1)
        return t * cos[None, None] + rh * sin[None, None]

    q, k = rope(q), rope(k)
    k = jnp.repeat(k, GROUP, axis=1)
    v = jnp.repeat(v, GROUP, axis=1)
    scores = jnp.einsum("bhqd,bhkd->bhqk", q, k) / math.sqrt(DH) + mask[None, None]
    p = jax.nn.softmax(scores, axis=-1)
    attn = jnp.einsum("bhqk,bhkd->bhqd", p, v)
    attn = attn.transpose(0, 2, 1, 3).reshape(B, S, QD)
    x = res + attn @ wo

    # MLP block
    res = x
    xn = rms(x, w_post)
    g = jax.nn.gelu(xn @ wg, approximate=True)
    return res + (g * (xn @ wu)) @ wd


# ---------------- setup ----------------
def make_rope(seq_len, dim, theta):
    inv_freq = 1.0 / (theta ** (jnp.arange(0, dim, 2, dtype=jnp.float32) / dim))
    pos = jnp.arange(seq_len, dtype=jnp.float32)
    freqs = pos[:, None] * inv_freq[None, :]          # (S, DH/2)
    emb = jnp.concatenate([freqs, freqs], axis=-1)    # (S, DH)
    return jnp.cos(emb), jnp.sin(emb)


if __name__ == "__main__":
    key = jax.random.PRNGKey(0)
    ks = jax.random.split(key, 10)
    scale = 0.02

    x = jax.random.normal(ks[0], (B, S, H), jnp.float32)

    w_in = 0.1 * jax.random.normal(ks[1], (1, H), jnp.float32)      # input_layernorm weight
    wq = scale * jax.random.normal(ks[2], (H, NH * DH), jnp.float32)
    wk = scale * jax.random.normal(ks[3], (H, NKV * DH), jnp.float32)
    wv = scale * jax.random.normal(ks[4], (H, NKV * DH), jnp.float32)
    wo = scale * jax.random.normal(ks[5], (NH * DH, H), jnp.float32)
    w_post = 0.1 * jax.random.normal(ks[6], (1, H), jnp.float32)    # post_attention_layernorm weight
    wg = scale * jax.random.normal(ks[7], (H, INTER), jnp.float32)
    wu = scale * jax.random.normal(ks[8], (H, INTER), jnp.float32)
    wd = scale * jax.random.normal(ks[9], (INTER, H), jnp.float32)
    params = (w_in, wq, wk, wv, wo, w_post, wg, wu, wd)

    cos, sin = make_rope(S, DH, ROPE_THETA)

    # causal additive attention mask, shared across batch: (S, S)
    mask = jnp.where(jnp.tril(jnp.ones((S, S), jnp.bool_)), 0.0, NEG_INF).astype(jnp.float32)

    prepared = prepare_layer(params, cos, sin, mask)   # one-time weight fusion

    out = jax.block_until_ready(gemma_decoder_layer(x, prepared))
    ref = jax.block_until_ready(reference(x, params, cos, sin, mask))

    assert out.shape == (B, S, H)
    # tolerance covers bf16 MXU operands + approximate (EUP) softmax reciprocal
    assert jnp.allclose(out, ref, atol=2e-3, rtol=2e-3), float(jnp.max(jnp.abs(out - ref)))
    print("KERNEL_OK")
</pallas_src>

<mosaic_0001>
module attributes {stable_mosaic.version = 11 : i64} {
  func.func @decoder_kernel(%arg0: memref<16x64xf32, #tpu.memory_space<vmem>>, %arg1: memref<64x320xbf16, #tpu.memory_space<vmem>>, %arg2: memref<64x64xbf16, #tpu.memory_space<vmem>>, %arg3: memref<64x256xbf16, #tpu.memory_space<vmem>>, %arg4: memref<128x64xbf16, #tpu.memory_space<vmem>>, %arg5: memref<16x256xf32, #tpu.memory_space<vmem>>, %arg6: memref<16x64xf32, #tpu.memory_space<vmem>>, %arg7: memref<16x64xf32, #tpu.memory_space<vmem>>) attributes {dimension_semantics = [], scalar_prefetch = 0 : i64, scratch_operands = 1 : i64, tpu.core_type = #tpu.core_type<tc>} {
    %c0 = arith.constant 0 : index
    %c0_0 = arith.constant 0 : index
    %0 = vector.load %arg0[%c0, %c0_0] : memref<16x64xf32, #tpu.memory_space<vmem>>, vector<16x64xf32>
    %c0_1 = arith.constant 0 : index
    %c0_2 = arith.constant 0 : index
    %1 = vector.load %arg5[%c0_1, %c0_2] : memref<16x256xf32, #tpu.memory_space<vmem>>, vector<16x256xf32>
    %2 = vector.extract_strided_slice %1 {offsets = [0, 0], sizes = [16, 64], strides = [1, 1]} : vector<16x256xf32> to vector<16x64xf32>
    %3 = vector.extract_strided_slice %1 {offsets = [0, 64], sizes = [16, 64], strides = [1, 1]} : vector<16x256xf32> to vector<16x64xf32>
    %4 = vector.extract_strided_slice %1 {offsets = [0, 128], sizes = [1, 64], strides = [1, 1]} : vector<16x256xf32> to vector<1x64xf32>
    %5 = vector.extract_strided_slice %1 {offsets = [1, 128], sizes = [1, 64], strides = [1, 1]} : vector<16x256xf32> to vector<1x64xf32>
    %6 = vector.extract_strided_slice %1 {offsets = [0, 192], sizes = [8, 8], strides = [1, 1]} : vector<16x256xf32> to vector<8x8xf32>
    %7 = arith.mulf %0, %0 : vector<16x64xf32>
    %cst = arith.constant dense<0.000000e+00> : vector<16xf32>
    %8 = vector.multi_reduction <add>, %7, %cst [1] : vector<16x64xf32> to vector<16xf32>
    %9 = vector.shape_cast %8 : vector<16xf32> to vector<16x1xf32>
    %cst_3 = arith.constant 6.400000e+01 : f32
    %10 = vector.broadcast %cst_3 : f32 to vector<16x1xf32>
    %11 = arith.divf %9, %10 : vector<16x1xf32>
    %cst_4 = arith.constant 9.99999997E-7 : f32
    %12 = vector.broadcast %cst_4 : f32 to vector<16x1xf32>
    %13 = arith.addf %11, %12 : vector<16x1xf32>
    %14 = math.rsqrt %13 : vector<16x1xf32>
    %15 = vector.broadcast %14 : vector<16x1xf32> to vector<16x64xf32>
    %16 = arith.mulf %0, %15 : vector<16x64xf32>
    %cst_5 = arith.constant 1.000000e+00 : f32
    %17 = vector.broadcast %cst_5 : f32 to vector<1x64xf32>
    %18 = arith.addf %17, %4 : vector<1x64xf32>
    %19 = vector.broadcast %18 : vector<1x64xf32> to vector<16x64xf32>
    %20 = arith.mulf %16, %19 : vector<16x64xf32>
    %21 = arith.truncf %20 : vector<16x64xf32> to vector<16x64xbf16>
    %c0_6 = arith.constant 0 : index
    %c0_7 = arith.constant 0 : index
    %22 = vector.load %arg1[%c0_6, %c0_7] : memref<64x320xbf16, #tpu.memory_space<vmem>>, vector<64x320xbf16>
    %cst_8 = arith.constant dense<0.000000e+00> : vector<16x320xf32>
    %23 = tpu.matmul %21, %22, %cst_8 {dimension_numbers = #tpu.dot_dimension_numbers<[1], [0], [0], [1], [0, 0, 1, 1], [], []>} : vector<16x64xbf16>, vector<64x320xbf16>, vector<16x320xf32> -> vector<16x320xf32>
    %24 = vector.extract_strided_slice %23 {offsets = [0, 0], sizes = [16, 64], strides = [1, 1]} : vector<16x320xf32> to vector<16x64xf32>
    %25 = arith.mulf %24, %2 : vector<16x64xf32>
    %26 = vector.extract_strided_slice %23 {offsets = [0, 192], sizes = [16, 64], strides = [1, 1]} : vector<16x320xf32> to vector<16x64xf32>
    %27 = arith.mulf %26, %3 : vector<16x64xf32>
    %28 = arith.addf %25, %27 : vector<16x64xf32>
    %29 = vector.extract_strided_slice %23 {offsets = [0, 64], sizes = [16, 64], strides = [1, 1]} : vector<16x320xf32> to vector<16x64xf32>
    %30 = arith.mulf %29, %2 : vector<16x64xf32>
    %31 = vector.extract_strided_slice %23 {offsets = [0, 256], sizes = [16, 64], strides = [1, 1]} : vector<16x320xf32> to vector<16x64xf32>
    %32 = arith.mulf %31, %3 : vector<16x64xf32>
    %33 = arith.addf %30, %32 : vector<16x64xf32>
    %34 = vector.extract_strided_slice %23 {offsets = [0, 128], sizes = [16, 64], strides = [1, 1]} : vector<16x320xf32> to vector<16x64xf32>
    %35 = vector.shape_cast %28 : vector<16x64xf32> to vector<2x8x64xf32>
    %36 = vector.shape_cast %33 : vector<16x64xf32> to vector<2x8x64xf32>
    %37 = vector.shape_cast %34 : vector<16x64xf32> to vector<2x8x64xf32>
    %38 = vector.extract_strided_slice %35 {offsets = [0, 0, 0], sizes = [2, 8, 16], strides = [1, 1, 1]} : vector<2x8x64xf32> to vector<2x8x16xf32>
    %39 = arith.truncf %38 : vector<2x8x16xf32> to vector<2x8x16xbf16>
    %40 = vector.extract_strided_slice %36 {offsets = [0, 0, 0], sizes = [2, 8, 16], strides = [1, 1, 1]} : vector<2x8x64xf32> to vector<2x8x16xf32>
    %41 = arith.truncf %40 : vector<2x8x16xf32> to vector<2x8x16xbf16>
    "tpu.trace_start"() <{level = 10 : i32, message = "bqd,bkd->bqk"}> : () -> ()
    %cst_9 = arith.constant dense<0.000000e+00> : vector<2x8x8xf32>
    %42 = tpu.matmul %39, %41, %cst_9 {dimension_numbers = #tpu.dot_dimension_numbers<[2], [2], [1], [1], [0, 0, 0, 1, 1, 1], [0], [0]>} : vector<2x8x16xbf16>, vector<2x8x16xbf16>, vector<2x8x8xf32> -> vector<2x8x8xf32>
    "tpu.trace_stop"() : () -> ()
    %43 = vector.shape_cast %6 : vector<8x8xf32> to vector<1x8x8xf32>
    %44 = vector.broadcast %43 : vector<1x8x8xf32> to vector<2x8x8xf32>
    %45 = arith.addf %42, %44 : vector<2x8x8xf32>
    %cst_10 = arith.constant dense<0xFF800000> : vector<2x8xf32>
    %46 = vector.multi_reduction <maximumf>, %45, %cst_10 [2] : vector<2x8x8xf32> to vector<2x8xf32>
    %47 = vector.shape_cast %46 : vector<2x8xf32> to vector<2x8x1xf32>
    %48 = vector.broadcast %47 : vector<2x8x1xf32> to vector<2x8x8xf32>
    %49 = arith.subf %45, %48 : vector<2x8x8xf32>
    %50 = math.exp %49 : vector<2x8x8xf32>
    %cst_11 = arith.constant dense<0.000000e+00> : vector<2x8xf32>
    %51 = vector.multi_reduction <add>, %50, %cst_11 [2] : vector<2x8x8xf32> to vector<2x8xf32>
    %52 = vector.shape_cast %51 : vector<2x8xf32> to vector<2x8x1xf32>
    %53 = tpu.reciprocal %52 {approx = true} : vector<2x8x1xf32> -> vector<2x8x1xf32>
    %54 = vector.broadcast %53 : vector<2x8x1xf32> to vector<2x8x8xf32>
    %55 = arith.mulf %50, %54 : vector<2x8x8xf32>
    %56 = vector.extract_strided_slice %37 {offsets = [0, 0, 0], sizes = [2, 8, 16], strides = [1, 1, 1]} : vector<2x8x64xf32> to vector<2x8x16xf32>
    %57 = arith.truncf %56 : vector<2x8x16xf32> to vector<2x8x16xbf16>
    %58 = arith.truncf %55 : vector<2x8x8xf32> to vector<2x8x8xbf16>
    "tpu.trace_start"() <{level = 10 : i32, message = "bqk,bkd->bqd"}> : () -> ()
    %cst_12 = arith.constant dense<0.000000e+00> : vector<2x8x16xf32>
    %59 = tpu.matmul %58, %57, %cst_12 {dimension_numbers = #tpu.dot_dimension_numbers<[2], [1], [1], [2], [0, 0, 0, 1, 1, 2], [0], [0]>} : vector<2x8x8xbf16>, vector<2x8x16xbf16>, vector<2x8x16xf32> -> vector<2x8x16xf32>
    "tpu.trace_stop"() : () -> ()
    %60 = vector.shape_cast %59 : vector<2x8x16xf32> to vector<16x16xf32>
    %c0_13 = arith.constant 0 : index
    %c0_14 = arith.constant 0 : index
    %61 = vector.load %arg7[%c0_13, %c0_14] : memref<16x64xf32, #tpu.memory_space<vmem>>, vector<16x16xf32>
    tpu.vector_store %arg7[%c0_13, %c0_14], %60 {strides = array<i32>} : memref<16x64xf32, #tpu.memory_space<vmem>>, vector<16x16xf32>,
    %62 = vector.extract_strided_slice %35 {offsets = [0, 0, 16], sizes = [2, 8, 16], strides = [1, 1, 1]} : vector<2x8x64xf32> to vector<2x8x16xf32>
    %63 = arith.truncf %62 : vector<2x8x16xf32> to vector<2x8x16xbf16>
    %64 = vector.extract_strided_slice %36 {offsets = [0, 0, 16], sizes = [2, 8, 16], strides = [1, 1, 1]} : vector<2x8x64xf32> to vector<2x8x16xf32>
    %65 = arith.truncf %64 : vector<2x8x16xf32> to vector<2x8x16xbf16>
    "tpu.trace_start"() <{level = 10 : i32, message = "bqd,bkd->bqk"}> : () -> ()
    %cst_15 = arith.constant dense<0.000000e+00> : vector<2x8x8xf32>
    %66 = tpu.matmul %63, %65, %cst_15 {dimension_numbers = #tpu.dot_dimension_numbers<[2], [2], [1], [1], [0, 0, 0, 1, 1, 1], [0], [0]>} : vector<2x8x16xbf16>, vector<2x8x16xbf16>, vector<2x8x8xf32> -> vector<2x8x8xf32>
    "tpu.trace_stop"() : () -> ()
    %67 = vector.shape_cast %6 : vector<8x8xf32> to vector<1x8x8xf32>
    %68 = vector.broadcast %67 : vector<1x8x8xf32> to vector<2x8x8xf32>
    %69 = arith.addf %66, %68 : vector<2x8x8xf32>
    %cst_16 = arith.constant dense<0xFF800000> : vector<2x8xf32>
    %70 = vector.multi_reduction <maximumf>, %69, %cst_16 [2] : vector<2x8x8xf32> to vector<2x8xf32>
    %71 = vector.shape_cast %70 : vector<2x8xf32> to vector<2x8x1xf32>
    %72 = vector.broadcast %71 : vector<2x8x1xf32> to vector<2x8x8xf32>
    %73 = arith.subf %69, %72 : vector<2x8x8xf32>
    %74 = math.exp %73 : vector<2x8x8xf32>
    %cst_17 = arith.constant dense<0.000000e+00> : vector<2x8xf32>
    %75 = vector.multi_reduction <add>, %74, %cst_17 [2] : vector<2x8x8xf32> to vector<2x8xf32>
    %76 = vector.shape_cast %75 : vector<2x8xf32> to vector<2x8x1xf32>
    %77 = tpu.reciprocal %76 {approx = true} : vector<2x8x1xf32> -> vector<2x8x1xf32>
    %78 = vector.broadcast %77 : vector<2x8x1xf32> to vector<2x8x8xf32>
    %79 = arith.mulf %74, %78 : vector<2x8x8xf32>
    %80 = vector.extract_strided_slice %37 {offsets = [0, 0, 16], sizes = [2, 8, 16], strides = [1, 1, 1]} : vector<2x8x64xf32> to vector<2x8x16xf32>
    %81 = arith.truncf %80 : vector<2x8x16xf32> to vector<2x8x16xbf16>
    %82 = arith.truncf %79 : vector<2x8x8xf32> to vector<2x8x8xbf16>
    "tpu.trace_start"() <{level = 10 : i32, message = "bqk,bkd->bqd"}> : () -> ()
    %cst_18 = arith.constant dense<0.000000e+00> : vector<2x8x16xf32>
    %83 = tpu.matmul %82, %81, %cst_18 {dimension_numbers = #tpu.dot_dimension_numbers<[2], [1], [1], [2], [0, 0, 0, 1, 1, 2], [0], [0]>} : vector<2x8x8xbf16>, vector<2x8x16xbf16>, vector<2x8x16xf32> -> vector<2x8x16xf32>
    "tpu.trace_stop"() : () -> ()
    %84 = vector.shape_cast %83 : vector<2x8x16xf32> to vector<16x16xf32>
    %c0_19 = arith.constant 0 : index
    %c16 = arith.constant 16 : index
    %85 = vector.load %arg7[%c0_19, %c16] : memref<16x64xf32, #tpu.memory_space<vmem>>, vector<16x16xf32>
    tpu.vector_store %arg7[%c0_19, %c16], %84 {strides = array<i32>} : memref<16x64xf32, #tpu.memory_space<vmem>>, vector<16x16xf32>,
    %86 = vector.extract_strided_slice %35 {offsets = [0, 0, 32], sizes = [2, 8, 16], strides = [1, 1, 1]} : vector<2x8x64xf32> to vector<2x8x16xf32>
    %87 = arith.truncf %86 : vector<2x8x16xf32> to vector<2x8x16xbf16>
    %88 = vector.extract_strided_slice %36 {offsets = [0, 0, 32], sizes = [2, 8, 16], strides = [1, 1, 1]} : vector<2x8x64xf32> to vector<2x8x16xf32>
    %89 = arith.truncf %88 : vector<2x8x16xf32> to vector<2x8x16xbf16>
    "tpu.trace_start"() <{level = 10 : i32, message = "bqd,bkd->bqk"}> : () -> ()
    %cst_20 = arith.constant dense<0.000000e+00> : vector<2x8x8xf32>
    %90 = tpu.matmul %87, %89, %cst_20 {dimension_numbers = #tpu.dot_dimension_numbers<[2], [2], [1], [1], [0, 0, 0, 1, 1, 1], [0], [0]>} : vector<2x8x16xbf16>, vector<2x8x16xbf16>, vector<2x8x8xf32> -> vector<2x8x8xf32>
    "tpu.trace_stop"() : () -> ()
    %91 = vector.shape_cast %6 : vector<8x8xf32> to vector<1x8x8xf32>
    %92 = vector.broadcast %91 : vector<1x8x8xf32> to vector<2x8x8xf32>
    %93 = arith.addf %90, %92 : vector<2x8x8xf32>
    %cst_21 = arith.constant dense<0xFF800000> : vector<2x8xf32>
    %94 = vector.multi_reduction <maximumf>, %93, %cst_21 [2] : vector<2x8x8xf32> to vector<2x8xf32>
    %95 = vector.shape_cast %94 : vector<2x8xf32> to vector<2x8x1xf32>
    %96 = vector.broadcast %95 : vector<2x8x1xf32> to vector<2x8x8xf32>
    %97 = arith.subf %93, %96 : vector<2x8x8xf32>
    %98 = math.exp %97 : vector<2x8x8xf32>
    %cst_22 = arith.constant dense<0.000000e+00> : vector<2x8xf32>
    %99 = vector.multi_reduction <add>, %98, %cst_22 [2] : vector<2x8x8xf32> to vector<2x8xf32>
    %100 = vector.shape_cast %99 : vector<2x8xf32> to vector<2x8x1xf32>
    %101 = tpu.reciprocal %100 {approx = true} : vector<2x8x1xf32> -> vector<2x8x1xf32>
    %102 = vector.broadcast %101 : vector<2x8x1xf32> to vector<2x8x8xf32>
    %103 = arith.mulf %98, %102 : vector<2x8x8xf32>
    %104 = vector.extract_strided_slice %37 {offsets = [0, 0, 32], sizes = [2, 8, 16], strides = [1, 1, 1]} : vector<2x8x64xf32> to vector<2x8x16xf32>
    %105 = arith.truncf %104 : vector<2x8x16xf32> to vector<2x8x16xbf16>
    %106 = arith.truncf %103 : vector<2x8x8xf32> to vector<2x8x8xbf16>
    "tpu.trace_start"() <{level = 10 : i32, message = "bqk,bkd->bqd"}> : () -> ()
    %cst_23 = arith.constant dense<0.000000e+00> : vector<2x8x16xf32>
    %107 = tpu.matmul %106, %105, %cst_23 {dimension_numbers = #tpu.dot_dimension_numbers<[2], [1], [1], [2], [0, 0, 0, 1, 1, 2], [0], [0]>} : vector<2x8x8xbf16>, vector<2x8x16xbf16>, vector<2x8x16xf32> -> vector<2x8x16xf32>
    "tpu.trace_stop"() : () -> ()
    %108 = vector.shape_cast %107 : vector<2x8x16xf32> to vector<16x16xf32>
    %c0_24 = arith.constant 0 : index
    %c32 = arith.constant 32 : index
    %109 = vector.load %arg7[%c0_24, %c32] : memref<16x64xf32, #tpu.memory_space<vmem>>, vector<16x16xf32>
    tpu.vector_store %arg7[%c0_24, %c32], %108 {strides = array<i32>} : memref<16x64xf32, #tpu.memory_space<vmem>>, vector<16x16xf32>,
    %110 = vector.extract_strided_slice %35 {offsets = [0, 0, 48], sizes = [2, 8, 16], strides = [1, 1, 1]} : vector<2x8x64xf32> to vector<2x8x16xf32>
    %111 = arith.truncf %110 : vector<2x8x16xf32> to vector<2x8x16xbf16>
    %112 = vector.extract_strided_slice %36 {offsets = [0, 0, 48], sizes = [2, 8, 16], strides = [1, 1, 1]} : vector<2x8x64xf32> to vector<2x8x16xf32>
    %113 = arith.truncf %112 : vector<2x8x16xf32> to vector<2x8x16xbf16>
    "tpu.trace_start"() <{level = 10 : i32, message = "bqd,bkd->bqk"}> : () -> ()
    %cst_25 = arith.constant dense<0.000000e+00> : vector<2x8x8xf32>
    %114 = tpu.matmul %111, %113, %cst_25 {dimension_numbers = #tpu.dot_dimension_numbers<[2], [2], [1], [1], [0, 0, 0, 1, 1, 1], [0], [0]>} : vector<2x8x16xbf16>, vector<2x8x16xbf16>, vector<2x8x8xf32> -> vector<2x8x8xf32>
    "tpu.trace_stop"() : () -> ()
    %115 = vector.shape_cast %6 : vector<8x8xf32> to vector<1x8x8xf32>
    %116 = vector.broadcast %115 : vector<1x8x8xf32> to vector<2x8x8xf32>
    %117 = arith.addf %114, %116 : vector<2x8x8xf32>
    %cst_26 = arith.constant dense<0xFF800000> : vector<2x8xf32>
    %118 = vector.multi_reduction <maximumf>, %117, %cst_26 [2] : vector<2x8x8xf32> to vector<2x8xf32>
    %119 = vector.shape_cast %118 : vector<2x8xf32> to vector<2x8x1xf32>
    %120 = vector.broadcast %119 : vector<2x8x1xf32> to vector<2x8x8xf32>
    %121 = arith.subf %117, %120 : vector<2x8x8xf32>
    %122 = math.exp %121 : vector<2x8x8xf32>
    %cst_27 = arith.constant dense<0.000000e+00> : vector<2x8xf32>
    %123 = vector.multi_reduction <add>, %122, %cst_27 [2] : vector<2x8x8xf32> to vector<2x8xf32>
    %124 = vector.shape_cast %123 : vector<2x8xf32> to vector<2x8x1xf32>
    %125 = tpu.reciprocal %124 {approx = true} : vector<2x8x1xf32> -> vector<2x8x1xf32>
    %126 = vector.broadcast %125 : vector<2x8x1xf32> to vector<2x8x8xf32>
    %127 = arith.mulf %122, %126 : vector<2x8x8xf32>
    %128 = vector.extract_strided_slice %37 {offsets = [0, 0, 48], sizes = [2, 8, 16], strides = [1, 1, 1]} : vector<2x8x64xf32> to vector<2x8x16xf32>
    %129 = arith.truncf %128 : vector<2x8x16xf32> to vector<2x8x16xbf16>
    %130 = arith.truncf %127 : vector<2x8x8xf32> to vector<2x8x8xbf16>
    "tpu.trace_start"() <{level = 10 : i32, message = "bqk,bkd->bqd"}> : () -> ()
    %cst_28 = arith.constant dense<0.000000e+00> : vector<2x8x16xf32>
    %131 = tpu.matmul %130, %129, %cst_28 {dimension_numbers = #tpu.dot_dimension_numbers<[2], [1], [1], [2], [0, 0, 0, 1, 1, 2], [0], [0]>} : vector<2x8x8xbf16>, vector<2x8x16xbf16>, vector<2x8x16xf32> -> vector<2x8x16xf32>
    "tpu.trace_stop"() : () -> ()
    %132 = vector.shape_cast %131 : vector<2x8x16xf32> to vector<16x16xf32>
    %c0_29 = arith.constant 0 : index
    %c48 = arith.constant 48 : index
    %133 = vector.load %arg7[%c0_29, %c48] : memref<16x64xf32, #tpu.memory_space<vmem>>, vector<16x16xf32>
    tpu.vector_store %arg7[%c0_29, %c48], %132 {strides = array<i32>} : memref<16x64xf32, #tpu.memory_space<vmem>>, vector<16x16xf32>,
    %c0_30 = arith.constant 0 : index
    %c0_31 = arith.constant 0 : index
    %134 = vector.load %arg7[%c0_30, %c0_31] : memref<16x64xf32, #tpu.memory_space<vmem>>, vector<16x64xf32>
    %135 = arith.truncf %134 : vector<16x64xf32> to vector<16x64xbf16>
    %c0_32 = arith.constant 0 : index
    %c0_33 = arith.constant 0 : index
    %136 = vector.load %arg2[%c0_32, %c0_33] : memref<64x64xbf16, #tpu.memory_space<vmem>>, vector<64x64xbf16>
    %cst_34 = arith.constant dense<0.000000e+00> : vector<16x64xf32>
    %137 = tpu.matmul %135, %136, %cst_34 {dimension_numbers = #tpu.dot_dimension_numbers<[1], [0], [0], [1], [0, 0, 1, 1], [], []>} : vector<16x64xbf16>, vector<64x64xbf16>, vector<16x64xf32> -> vector<16x64xf32>
    %138 = arith.addf %0, %137 : vector<16x64xf32>
    %139 = arith.mulf %138, %138 : vector<16x64xf32>
    %cst_35 = arith.constant dense<0.000000e+00> : vector<16xf32>
    %140 = vector.multi_reduction <add>, %139, %cst_35 [1] : vector<16x64xf32> to vector<16xf32>
    %141 = vector.shape_cast %140 : vector<16xf32> to vector<16x1xf32>
    %cst_36 = arith.constant 6.400000e+01 : f32
    %142 = vector.broadcast %cst_36 : f32 to vector<16x1xf32>
    %143 = arith.divf %141, %142 : vector<16x1xf32>
    %cst_37 = arith.constant 9.99999997E-7 : f32
    %144 = vector.broadcast %cst_37 : f32 to vector<16x1xf32>
    %145 = arith.addf %143, %144 : vector<16x1xf32>
    %146 = math.rsqrt %145 : vector<16x1xf32>
    %147 = vector.broadcast %146 : vector<16x1xf32> to vector<16x64xf32>
    %148 = arith.mulf %138, %147 : vector<16x64xf32>
    %cst_38 = arith.constant 1.000000e+00 : f32
    %149 = vector.broadcast %cst_38 : f32 to vector<1x64xf32>
    %150 = arith.addf %149, %5 : vector<1x64xf32>
    %151 = vector.broadcast %150 : vector<1x64xf32> to vector<16x64xf32>
    %152 = arith.mulf %148, %151 : vector<16x64xf32>
    %153 = arith.truncf %152 : vector<16x64xf32> to vector<16x64xbf16>
    %c0_39 = arith.constant 0 : index
    %c0_40 = arith.constant 0 : index
    %154 = vector.load %arg3[%c0_39, %c0_40] : memref<64x256xbf16, #tpu.memory_space<vmem>>, vector<64x256xbf16>
    %cst_41 = arith.constant dense<0.000000e+00> : vector<16x256xf32>
    %155 = tpu.matmul %153, %154, %cst_41 {dimension_numbers = #tpu.dot_dimension_numbers<[1], [0], [0], [1], [0, 0, 1, 1], [], []>} : vector<16x64xbf16>, vector<64x256xbf16>, vector<16x256xf32> -> vector<16x256xf32>
    %156 = vector.extract_strided_slice %155 {offsets = [0, 0], sizes = [16, 128], strides = [1, 1]} : vector<16x256xf32> to vector<16x128xf32>
    %cst_42 = arith.constant 5.000000e-01 : f32
    %157 = vector.broadcast %cst_42 : f32 to vector<16x128xf32>
    %158 = arith.mulf %157, %156 : vector<16x128xf32>
    %cst_43 = arith.constant 4.471500e-02 : f32
    %159 = vector.broadcast %cst_43 : f32 to vector<16x128xf32>
    %160 = arith.mulf %159, %156 : vector<16x128xf32>
    %161 = arith.mulf %160, %156 : vector<16x128xf32>
    %162 = arith.mulf %161, %156 : vector<16x128xf32>
    %163 = arith.addf %156, %162 : vector<16x128xf32>
    %cst_44 = arith.constant 0.797884583 : f32
    %164 = vector.broadcast %cst_44 : f32 to vector<16x128xf32>
    %165 = arith.mulf %164, %163 : vector<16x128xf32>
    %166 = math.tanh %165 : vector<16x128xf32>
    %cst_45 = arith.constant 1.000000e+00 : f32
    %167 = vector.broadcast %cst_45 : f32 to vector<16x128xf32>
    %168 = arith.addf %167, %166 : vector<16x128xf32>
    %169 = arith.mulf %158, %168 : vector<16x128xf32>
    %170 = vector.extract_strided_slice %155 {offsets = [0, 128], sizes = [16, 128], strides = [1, 1]} : vector<16x256xf32> to vector<16x128xf32>
    %171 = arith.mulf %169, %170 : vector<16x128xf32>
    %172 = arith.truncf %171 : vector<16x128xf32> to vector<16x128xbf16>
    %c0_46 = arith.constant 0 : index
    %c0_47 = arith.constant 0 : index
    %173 = vector.load %arg4[%c0_46, %c0_47] : memref<128x64xbf16, #tpu.memory_space<vmem>>, vector<128x64xbf16>
    %cst_48 = arith.constant dense<0.000000e+00> : vector<16x64xf32>
    %174 = tpu.matmul %172, %173, %cst_48 {dimension_numbers = #tpu.dot_dimension_numbers<[1], [0], [0], [1], [0, 0, 1, 1], [], []>} : vector<16x128xbf16>, vector<128x64xbf16>, vector<16x64xf32> -> vector<16x64xf32>
    %175 = arith.addf %138, %174 : vector<16x64xf32>
    %c0_49 = arith.constant 0 : index
    %c0_50 = arith.constant 0 : index
    %176 = vector.load %arg6[%c0_49, %c0_50] : memref<16x64xf32, #tpu.memory_space<vmem>>, vector<16x64xf32>
    tpu.vector_store %arg6[%c0_49, %c0_50], %175 {strides = array<i32>} : memref<16x64xf32, #tpu.memory_space<vmem>>, vector<16x64xf32>,
    return
  }
}

</mosaic_0001>

<llo_original>
// kernel: gemma_decoder_layer.1
$region0: #{gemma_decoder_layer.1}
  #allocation0 [shape = 'u32[]', space=smem, size = 0x4, offset = 0x4, fixed_abs, tag = 'smem constant byte address 0x4 - core index']
  #allocation1 [shape = 'u32[144,128]{1,0:T(1,128)}', space=vmem, size = 0x12000, scoped, tag = 'internal scratch']
  #allocation2 [shape = 'f32[16,64]{1,0:T(8,128)}', space=vmem, size = 0x2000, scoped, tag = 'scratch operand']
  %s0 = inlined_call_operand.hbm [shape: f32[16,64], index: 0, kind: input, shape index: {}]
  %s1 = inlined_call_operand.vmem [shape: bf16[64,320], index: 1, kind: input, shape index: {}]
  %s2 = inlined_call_operand.hbm [shape: bf16[64,64], index: 2, kind: input, shape index: {}]
  %s3 = inlined_call_operand.hbm [shape: bf16[64,256], index: 3, kind: input, shape index: {}]
  %s4 = inlined_call_operand.vmem [shape: bf16[128,64], index: 4, kind: input, shape index: {}]
  %s5 = inlined_call_operand.hbm [shape: f32[16,256], index: 5, kind: input, shape index: {}]
  %s6 = inlined_call_operand.hbm [shape: f32[16,64], index: 6, kind: output, shape index: {}]
  %s7 = sld [smem:[#allocation0]]
  $region50: #{gemma_decoder_layer.1} parent=0
    _
  %s9 = ssub.s32 1, %s7
  %s10 = scalar_select 0, %s9, %s7
  $region1: #{gemma_decoder_layer.1} parent=0
    #allocation3 [shape = 'u8[8192]{0}', space=vmem, size = 0x2000, scoped, tag = 'input window, operand 0, single buffered']
    #allocation4 [shape = 's32[1]{0}', space=sflag, size = 0x4, scoped, tag = 'scoped memory for gemma_decoder_layer.1']
    #allocation5 [shape = 's32[1]{0}', space=sflag, size = 0x4, scoped, tag = 'scoped memory for gemma_decoder_layer.1']
    #allocation6 [shape = 'u8[16384]{0}', space=vmem, size = 0x4000, scoped, tag = 'input window, operand 2, single buffered']
    #allocation7 [shape = 's32[1]{0}', space=sflag, size = 0x4, scoped, tag = 'scoped memory for gemma_decoder_layer.1']
    #allocation8 [shape = 'u8[32768]{0}', space=vmem, size = 0x8000, scoped, tag = 'input window, operand 3, single buffered']
    #allocation9 [shape = 'u8[16384]{0}', space=vmem, size = 0x4000, scoped, tag = 'input window, operand 5, single buffered']
    #allocation10 [shape = 's32[1]{0}', space=sflag, size = 0x4, scoped, tag = 'scoped memory for gemma_decoder_layer.1']
    #allocation11 [shape = 'u8[8192]{0}', space=vmem, size = 0x2000, scoped, tag = 'output window, operand 0, single buffered']
    %11 = vsyncpa [#allocation4], 0
    %12 = vsyncpa [#allocation7], 0
    %13 = vsyncpa [#allocation10], 0
    %14 = vsyncpa [#allocation5], 0
    // Predicated region
    $region2: #{gemma_decoder_layer.1} parent=1 // pred_check
      _
    $region3: #{gemma_decoder_layer.1} parent=1 // pred_check_branch
      %16 = sbr.rel (0) target = $region5
    $region4: #{gemma_decoder_layer.1} parent=1 // pred_region
      %s18 = ssub.s32 256, 256
      %19 = vsyncadd [#allocation4], %s18
      %s20 = sshll.u32 [#allocation3], 4
      %s21 = int_to_ptr.vmem [resolvable:$true] %s20
      %26 = dma.hbm_to_vmem [thread:$0]  %s0, 256, %s21, [#allocation4], 128, 128, 8
    $region5: #{gemma_decoder_layer.1} parent=1 // pred_fallthru
      _
    // Predicated region
    $region6: #{gemma_decoder_layer.1} parent=1 // pred_check
      _
    $region7: #{gemma_decoder_layer.1} parent=1 // pred_check_branch
      %28 = sbr.rel (0) target = $region9
    $region8: #{gemma_decoder_layer.1} parent=1 // pred_region
      _
    $region9: #{gemma_decoder_layer.1} parent=1 // pred_fallthru
      _
    // Predicated region
    $region10: #{gemma_decoder_layer.1} parent=1 // pred_check
      _
    $region11: #{gemma_decoder_layer.1} parent=1 // pred_check_branch
      %30 = sbr.rel (0) target = $region13
    $region12: #{gemma_decoder_layer.1} parent=1 // pred_region
      %s32 = ssub.s32 512, 512
      %33 = vsyncadd [#allocation7], %s32
      %s34 = sshll.u32 [#allocation6], 4
      %s35 = int_to_ptr.vmem [resolvable:$true] %s34
      %40 = dma.hbm_to_vmem [thread:$0]  %s2, 512, %s35, [#allocation7], 64, 64, 4
    $region13: #{gemma_decoder_layer.1} parent=1 // pred_fallthru
      _
    // Predicated region
    $region14: #{gemma_decoder_layer.1} parent=1 // pred_check
      _
    $region15: #{gemma_decoder_layer.1} parent=1 // pred_check_branch
      %42 = sbr.rel (0) target = $region17
    $region16: #{gemma_decoder_layer.1} parent=1 // pred_region
      %s44 = ssub.s32 1024, 1024
      %45 = vsyncadd [#allocation7], %s44
      %s46 = sshll.u32 [#allocation8], 4
      %s47 = int_to_ptr.vmem [resolvable:$true] %s46
      %52 = dma.hbm_to_vmem [thread:$0]  %s3, 1024, %s47, [#allocation7], 128, 128, 8
    $region17: #{gemma_decoder_layer.1} parent=1 // pred_fallthru
      _
    // Predicated region
    $region18: #{gemma_decoder_layer.1} parent=1 // pred_check
      _
    $region19: #{gemma_decoder_layer.1} parent=1 // pred_check_branch
      %54 = sbr.rel (0) target = $region21
    $region20: #{gemma_decoder_layer.1} parent=1 // pred_region
      _
    $region21: #{gemma_decoder_layer.1} parent=1 // pred_fallthru
      _
    // Predicated region
    $region22: #{gemma_decoder_layer.1} parent=1 // pred_check
      _
    $region23: #{gemma_decoder_layer.1} parent=1 // pred_check_branch
      %56 = sbr.rel (0) target = $region25
    $region24: #{gemma_decoder_layer.1} parent=1 // pred_region
      %s58 = ssub.s32 512, 512
      %59 = vsyncadd [#allocation10], %s58
      %s60 = sshll.u32 [#allocation9], 4
      %s61 = int_to_ptr.vmem [resolvable:$true] %s60
      %66 = dma.hbm_to_vmem [thread:$0]  %s5, 512, %s61, [#allocation10], 256, 256, 16
    $region25: #{gemma_decoder_layer.1} parent=1 // pred_fallthru
      _
    // Predicated region
    $region26: #{gemma_decoder_layer.1} parent=1 // pred_check
      _
    $region27: #{gemma_decoder_layer.1} parent=1 // pred_check_branch
      %68 = sbr.rel (0) target = $region29
    $region28: #{gemma_decoder_layer.1} parent=1 // pred_region
      %69 = dma.done [#allocation4], 256
    $region29: #{gemma_decoder_layer.1} parent=1 // pred_fallthru
      _
    // Predicated region
    $region30: #{gemma_decoder_layer.1} parent=1 // pred_check
      _
    $region31: #{gemma_decoder_layer.1} parent=1 // pred_check_branch
      %71 = sbr.rel (0) target = $region33
    $region32: #{gemma_decoder_layer.1} parent=1 // pred_region
      %72 = dma.done [#allocation7], 512
    $region33: #{gemma_decoder_layer.1} parent=1 // pred_fallthru
      _
    // Predicated region
    $region34: #{gemma_decoder_layer.1} parent=1 // pred_check
      _
    $region35: #{gemma_decoder_layer.1} parent=1 // pred_check_branch
      %74 = sbr.rel (0) target = $region37
    $region36: #{gemma_decoder_layer.1} parent=1 // pred_region
      %75 = dma.done [#allocation7], 1024
    $region37: #{gemma_decoder_layer.1} parent=1 // pred_fallthru
      _
    // Predicated region
    $region38: #{gemma_decoder_layer.1} parent=1 // pred_check
      _
    $region39: #{gemma_decoder_layer.1} parent=1 // pred_check_branch
      %77 = sbr.rel (0) target = $region41
    $region40: #{gemma_decoder_layer.1} parent=1 // pred_region
      %78 = dma.done [#allocation10], 512
    $region41: #{gemma_decoder_layer.1} parent=1 // pred_fallthru
      _
    %v80 = vld [vmem:[#allocation3] sm:$0xff]
    %v81 = vld [vmem:[#allocation3 + $0x8] sm:$0xff]
    %v82 = vld [vmem:[#allocation9] sm:$0xff]
    %v83 = vld [vmem:[#allocation9 + $0x8] sm:$0xff]
    %v84 = vld [vmem:[#allocation9 + $0x10] sm:$0xff]
    %v85 = vmul.f32 %v80, %v80
    %v86 = vmul.f32 %v81, %v81
    %vm87 = vcmask 523264
    %v88 = vsel %vm87, %v85, 0.0
    %89 = vadd.xlane.f32.xlu0 %v88
    %v90 = vpop.xlane.xlu0 %89
    %v91 = vsel %vm87, %v86, 0.0
    %92 = vadd.xlane.f32.xlu0 %v91
    %v93 = vpop.xlane.xlu0 %92
    %v94 = vrcp.pop 64.0
    %v95 = vmul.f32 %v90, %v94
    %v96 = vmul.f32 %v93, %v94
    %v97 = vadd.f32 %v95, 1e-06
    %v98 = vadd.f32 %v96, 1e-06
    %v99 = vrsqrt.pop %v97
    %v100 = vrsqrt.pop %v98
    %v101 = vmul.f32 %v80, %v99
    %v102 = vmul.f32 %v81, %v100
    %v103 = vadd.f32 %v83, 1.0
    %v104 = vlaneseq
    %v105 = vshrl.u32 %v104, 7
    %v106 = vsub.s32 0, %v105
    %v107 = vrot.slane %v103, %v106
    %v108 = vmul.f32 %v101, %v107
    %v109 = vmul.f32 %v102, %v107
    %v110 = vpack.c.bf16 %v109, %v108
    %v111 = vld [vmem:[%s1] sm:$0xff]
    %v112 = vld [vmem:[%s1 + $0x8] sm:$0xf]
    %v113 = vld [vmem:[%s1 + $0xc] sm:$0xff]
    %v114 = vld [vmem:[%s1 + $0x14] sm:$0xf]
    %v115 = vld [vmem:[%s1 + $0x18] sm:$0xff]
    %v116 = vld [vmem:[%s1 + $0x20] sm:$0xf]
    %v117 = vld [vmem:[%s1 + $0x24] sm:$0xff]
    %v118 = vld [vmem:[%s1 + $0x2c] sm:$0xf]
    %v119 = vld [vmem:[%s1 + $0x30] sm:$0xff]
    %v120 = vld [vmem:[%s1 + $0x38] sm:$0xf]
    %v121 = vld [vmem:[%s1 + $0x3c] sm:$0xff]
    %v122 = vld [vmem:[%s1 + $0x44] sm:$0xf]
    %v123 = vld [vmem:[%s1 + $0x48] sm:$0xff]
    %v124 = vld [vmem:[%s1 + $0x50] sm:$0xf]
    %v125 = vld [vmem:[%s1 + $0x54] sm:$0xff]
    %v126 = vld [vmem:[%s1 + $0x5c] sm:$0xf]
    %v143 = vunpack.c.l.b16 %v111
    %v144 = vunpack.c.h.b16 %v111
    %v145 = vunpack.c.l.b16 %v112
    %v146 = vunpack.c.l.b16 %v113
    %v147 = vunpack.c.h.b16 %v113
    %v148 = vunpack.c.l.b16 %v114
    %v149 = vunpack.c.l.b16 %v115
    %v150 = vunpack.c.h.b16 %v115
    %v151 = vunpack.c.l.b16 %v116
    %v152 = vunpack.c.l.b16 %v117
    %v153 = vunpack.c.h.b16 %v117
    %v154 = vunpack.c.l.b16 %v118
    %v155 = vunpack.c.l.b16 %v119
    %v156 = vunpack.c.h.b16 %v119
    %v157 = vunpack.c.l.b16 %v120
    %v158 = vunpack.c.l.b16 %v121
    %v159 = vunpack.c.h.b16 %v121
    %v160 = vunpack.c.l.b16 %v122
    %v161 = vunpack.c.l.b16 %v123
    %v162 = vunpack.c.h.b16 %v123
    %v163 = vunpack.c.l.b16 %v124
    %v164 = vunpack.c.l.b16 %v125
    %v165 = vunpack.c.h.b16 %v125
    %v166 = vunpack.c.l.b16 %v126
    %v167 = vpack.c.b16 %v146, %v143
    %v168 = vpack.c.b16 %v147, %v144
    %v169 = vpack.c.b16 %v148, %v145
    %v170 = vpack.c.b16 %v152, %v149
    %v171 = vpack.c.b16 %v153, %v150
    %v172 = vpack.c.b16 %v154, %v151
    %v173 = vpack.c.b16 %v158, %v155
    %v174 = vpack.c.b16 %v159, %v156
    %v175 = vpack.c.b16 %v160, %v157
    %v176 = vpack.c.b16 %v164, %v161
    %v177 = vpack.c.b16 %v165, %v162
    %v178 = vpack.c.b16 %v166, %v163
    %v192 = vsel %vm87, %v110, 0
    %194 = vmatprep.subr.bf16.mxu0 %v168
    %195 = vmatpush1.bf16.msra.mxu0 %v167
    %196 = vmatprep.subr.bf16.mxu0 %v171
    %197 = vmatpush1.bf16.msra.mxu0 %v170
    %198 = vmatprep.subr.bf16.mxu0 %v174
    %199 = vmatpush1.bf16.msra.mxu0 %v173
    %200 = vmatprep.subr.bf16.mxu0 %v177
    %201 = vmatpush1.bf16.msra.mxu0 %v176
    %202 = vmatprep.subr.bf16.mxu0 0
    %203 = vmatpush1.bf16.msra.mxu0 0
    %204 = vmatprep.subr.bf16.mxu0 0
    %205 = vmatpush1.bf16.msra.mxu0 0
    %206 = vmatprep.subr.bf16.mxu0 0
    %207 = vmatpush1.bf16.msra.mxu0 0
    %208 = vmatprep.subr.bf16.mxu0 0
    %209 = vmatpush1.bf16.msra.mxu0 0
    %210 = vmatprep.subr.bf16.mxu0 0
    %211 = vmatpush1.bf16.msra.mxu0 0
    %212 = vmatprep.subr.bf16.mxu0 0
    %213 = vmatpush1.bf16.msra.mxu0 0
    %214 = vmatprep.subr.bf16.mxu0 0
    %215 = vmatpush1.bf16.msra.mxu0 0
    %216 = vmatprep.subr.bf16.mxu0 0
    %217 = vmatpush1.bf16.msra.mxu0 0
    %218 = vmatprep.subr.bf16.mxu0 0
    %219 = vmatpush1.bf16.msra.mxu0 0
    %220 = vmatprep.subr.bf16.mxu0 0
    %221 = vmatpush1.bf16.msra.mxu0 0
    %222 = vmatprep.subr.bf16.mxu0 0
    %223 = vmatpush1.bf16.msra.mxu0 0
    %224 = vmatprep.subr.bf16.mxu0 0
    %225 = vmatpush1.bf16.msra.mxu0 0
    %226 = vmatprep.mubr.bf16.mxu0 0
    %227 = vmatmul.mubr.bf16.gmra.mrb[0].mxu0 %v192
    %v228 = vpop.f32.mrb[0].mxu0
    %v229 = vadd.f32 0.0, %v228
    %v230 = vpop.f32.mrb[0].mxu0
    %v231 = vadd.f32 0.0, %v230
    %v232 = vpop.f32.mrb[0].mxu0
    %v233 = vadd.f32 0.0, %v232
    %v234 = vpop.f32.mrb[0].mxu0
    %v235 = vadd.f32 0.0, %v234
    %236 = vdwg.mxu0
    %237 = vmatprep.subr.bf16.mxu0 0
    %238 = vmatpush1.bf16.msra.mxu0 %v169
    %239 = vmatprep.subr.bf16.mxu0 0
    %240 = vmatpush1.bf16.msra.mxu0 %v172
    %241 = vmatprep.subr.bf16.mxu0 0
    %242 = vmatpush1.bf16.msra.mxu0 %v175
    %243 = vmatprep.subr.bf16.mxu0 0
    %244 = vmatpush1.bf16.msra.mxu0 %v178
    %245 = vmatprep.subr.bf16.mxu0 0
    %246 = vmatpush1.bf16.msra.mxu0 0
    %247 = vmatprep.subr.bf16.mxu0 0
    %248 = vmatpush1.bf16.msra.mxu0 0
    %249 = vmatprep.subr.bf16.mxu0 0
    %250 = vmatpush1.bf16.msra.mxu0 0
    %251 = vmatprep.subr.bf16.mxu0 0
    %252 = vmatpush1.bf16.msra.mxu0 0
    %253 = vmatprep.subr.bf16.mxu0 0
    %254 = vmatpush1.bf16.msra.mxu0 0
    %255 = vmatprep.subr.bf16.mxu0 0
    %256 = vmatpush1.bf16.msra.mxu0 0
    %257 = vmatprep.subr.bf16.mxu0 0
    %258 = vmatpush1.bf16.msra.mxu0 0
    %259 = vmatprep.subr.bf16.mxu0 0
    %260 = vmatpush1.bf16.msra.mxu0 0
    %261 = vmatprep.subr.bf16.mxu0 0
    %262 = vmatpush1.bf16.msra.mxu0 0
    %263 = vmatprep.subr.bf16.mxu0 0
    %264 = vmatpush1.bf16.msra.mxu0 0
    %265 = vmatprep.subr.bf16.mxu0 0
    %266 = vmatpush1.bf16.msra.mxu0 0
    %267 = vmatprep.subr.bf16.mxu0 0
    %268 = vmatpush1.bf16.msra.mxu0 0
    %269 = vmatprep.mubr.bf16.mxu0 0
    %270 = vmatmul.mubr.bf16.gmra.mrb[0].mxu0 %v192
    %v271 = vpop.f32.mrb[0].mxu0
    %v272 = vadd.f32 0.0, %v271
    %v273 = vpop.f32.mrb[0].mxu0
    %v274 = vpop.f32.mrb[0].mxu0
    %v275 = vadd.f32 0.0, %v274
    %v276 = vpop.f32.mrb[0].mxu0
    %277 = vdwg.mxu0
    %v278 = vmul.f32 %v229, %v82
    %v279 = vmul.f32 %v233, %v84
    %v280 = vmul.f32 %v231, %v82
    %v281 = vmul.f32 %v235, %v84
    %284 = vrot.lane.b32.xlu0 %v280, 64
    %v285 = vpop.permute.xlu0 %284
    %286 = vrot.lane.b32.xlu0 %v281, 64
    %v287 = vpop.permute.xlu0 %286
    %v290 = vadd.f32 %v278, %v285
    %v291 = vadd.f32 %v279, %v287
    %294 = vrot.lane.b32.xlu0 %v82, 64
    %v295 = vpop.permute.xlu0 %294
    %296 = vrot.lane.b32.xlu0 %v84, 64
    %v297 = vpop.permute.xlu0 %296
    %v300 = vmul.f32 %v229, %v295
    %v301 = vmul.f32 %v233, %v297
    %v302 = vmul.f32 %v272, %v295
    %v303 = vmul.f32 %v275, %v297
    %306 = vrot.lane.b32.xlu0 %v302, 64
    %v307 = vpop.permute.xlu0 %306
    %308 = vrot.lane.b32.xlu0 %v303, 64
    %v309 = vpop.permute.xlu0 %308
    %v312 = vadd.f32 %v300, %v307
    %v313 = vadd.f32 %v301, %v309
    %v314 = vpack.c.bf16 %v290, %v290
    %v315 = vpack.c.bf16 %v291, %v291
    %v316 = vpack.c.bf16 %v312, %v312
    %v317 = vpack.c.bf16 %v313, %v313
    %319 = vrot.lane.b32.xlu0 %v316, 64
    %v320 = vpop.permute.xlu0 %319
    %322 = vrot.lane.b32.xlu0 %v83, 64
    %v323 = vpop.permute.xlu0 %322
    %vm325 = vcmask 130048
    %v327 = vsel %vm325, %v314, 0
    %v330 = vsel %vm325, %v320, 0
    %332 = vmatprep.subr.bf16.mxu0 0
    %333 = vmatpush1.bf16.xpose.msra.mxu0 %v330
    %334 = vmatprep.subr.bf16.mxu0 0
    %335 = vmatpush1.bf16.xpose.msra.mxu0 0
    %336 = vmatprep.subr.bf16.mxu0 0
    %337 = vmatpush1.bf16.xpose.msra.mxu0 0
    %338 = vmatprep.subr.bf16.mxu0 0
    %339 = vmatpush1.bf16.xpose.msra.mxu0 0
    %340 = vmatprep.subr.bf16.mxu0 0
    %341 = vmatpush1.bf16.xpose.msra.mxu0 0
    %342 = vmatprep.subr.bf16.mxu0 0
    %343 = vmatpush1.bf16.xpose.msra.mxu0 0
    %344 = vmatprep.subr.bf16.mxu0 0
    %345 = vmatpush1.bf16.xpose.msra.mxu0 0
    %346 = vmatprep.subr.bf16.mxu0 0
    %347 = vmatpush1.bf16.xpose.msra.mxu0 0
    %348 = vmatprep.subr.bf16.mxu0 0
    %349 = vmatpush1.bf16.xpose.msra.mxu0 0
    %350 = vmatprep.subr.bf16.mxu0 0
    %351 = vmatpush1.bf16.xpose.msra.mxu0 0
    %352 = vmatprep.subr.bf16.mxu0 0
    %353 = vmatpush1.bf16.xpose.msra.mxu0 0
    %354 = vmatprep.subr.bf16.mxu0 0
    %355 = vmatpush1.bf16.xpose.msra.mxu0 0
    %356 = vmatprep.subr.bf16.mxu0 0
    %357 = vmatpush1.bf16.xpose.msra.mxu0 0
    %358 = vmatprep.subr.bf16.mxu0 0
    %359 = vmatpush1.bf16.xpose.msra.mxu0 0
    %360 = vmatprep.subr.bf16.mxu0 0
    %361 = vmatpush1.bf16.xpose.msra.mxu0 0
    %362 = vmatprep.subr.bf16.mxu0 0
    %363 = vmatpush1.bf16.xpose.msra.mxu0 0
    %364 = vmatprep.mubr.bf16.mxu0 0
    %365 = vmatmul.mubr.bf16.gmra.mrb[0].mxu0 %v327
    %v366 = vpop.f32.mrb[0].mxu0
    %v367 = vadd.f32 %v323, %v366
    %v368 = vpop.f32.mrb[0].mxu0
    %v369 = vpop.f32.mrb[0].mxu0
    %v370 = vpop.f32.mrb[0].mxu0
    %371 = vdwg.mxu0
    %373 = vrot.lane.b32.xlu0 %v317, 64
    %v374 = vpop.permute.xlu0 %373
    %v376 = vsel %vm325, %v315, 0
    %v379 = vsel %vm325, %v374, 0
    %381 = vmatprep.subr.bf16.mxu0 0
    %382 = vmatpush1.bf16.xpose.msra.mxu0 %v379
    %383 = vmatprep.subr.bf16.mxu0 0
    %384 = vmatpush1.bf16.xpose.msra.mxu0 0
    %385 = vmatprep.subr.bf16.mxu0 0
    %386 = vmatpush1.bf16.xpose.msra.mxu0 0
    %387 = vmatprep.subr.bf16.mxu0 0
    %388 = vmatpush1.bf16.xpose.msra.mxu0 0
    %389 = vmatprep.subr.bf16.mxu0 0
    %390 = vmatpush1.bf16.xpose.msra.mxu0 0
    %391 = vmatprep.subr.bf16.mxu0 0
    %392 = vmatpush1.bf16.xpose.msra.mxu0 0
    %393 = vmatprep.subr.bf16.mxu0 0
    %394 = vmatpush1.bf16.xpose.msra.mxu0 0
    %395 = vmatprep.subr.bf16.mxu0 0
    %396 = vmatpush1.bf16.xpose.msra.mxu0 0
    %397 = vmatprep.subr.bf16.mxu0 0
    %398 = vmatpush1.bf16.xpose.msra.mxu0 0
    %399 = vmatprep.subr.bf16.mxu0 0
    %400 = vmatpush1.bf16.xpose.msra.mxu0 0
    %401 = vmatprep.subr.bf16.mxu0 0
    %402 = vmatpush1.bf16.xpose.msra.mxu0 0
    %403 = vmatprep.subr.bf16.mxu0 0
    %404 = vmatpush1.bf16.xpose.msra.mxu0 0
    %405 = vmatprep.subr.bf16.mxu0 0
    %406 = vmatpush1.bf16.xpose.msra.mxu0 0
    %407 = vmatprep.subr.bf16.mxu0 0
    %408 = vmatpush1.bf16.xpose.msra.mxu0 0
    %409 = vmatprep.subr.bf16.mxu0 0
    %410 = vmatpush1.bf16.xpose.msra.mxu0 0
    %411 = vmatprep.subr.bf16.mxu0 0
    %412 = vmatpush1.bf16.xpose.msra.mxu0 0
    %413 = vmatprep.mubr.bf16.mxu0 0
    %414 = vmatmul.mubr.bf16.gmra.mrb[0].mxu0 %v376
    %v415 = vpop.f32.mrb[0].mxu0
    %v416 = vadd.f32 %v323, %v415
    %v417 = vpop.f32.mrb[0].mxu0
    %v418 = vpop.f32.mrb[0].mxu0
    %v419 = vpop.f32.mrb[0].mxu0
    %420 = vdwg.mxu0
    %vm421 = vcmask 64512
    %v422 = vsel %vm421, %v367, -inf
    %423 = vmax.xlane.f32.xlu0 %v422
    %v424 = vpop.xlane.xlu0 %423
    %v425 = vsel %vm421, %v416, -inf
    %426 = vmax.xlane.f32.xlu0 %v425
    %v427 = vpop.xlane.xlu0 %426
    %v428 = vsub.f32 %v367, %v424
    %v429 = vsub.f32 %v416, %v427
    %v430 = vmul.f32 %v428, 1.442695
    %v431 = vpow.pop %v430
    %v432 = vmul.f32 %v429, 1.442695
    %v433 = vpow.pop %v432
    %v434 = vsel %vm421, %v431, 0.0
    %435 = vadd.xlane.f32.xlu0 %v434
    %v436 = vpop.xlane.xlu0 %435
    %v437 = vsel %vm421, %v433, 0.0
    %438 = vadd.xlane.f32.xlu0 %v437
    %v439 = vpop.xlane.xlu0 %438
    %v440 = vrcp.pop %v436
    %v441 = vrcp.pop %v439
    %v442 = vmul.f32 %v431, %v440
    %v443 = vmul.f32 %v433, %v441
    %v444 = vpack.c.bf16 %v231, %v231
    %v445 = vpack.c.bf16 %v235, %v235
    %v446 = vpack.c.bf16 %v442, %v442
    %v447 = vpack.c.bf16 %v443, %v443
    %v449 = vsel %vm421, %v446, 0
    %vm451 = vcmask 1043456
    %v453 = vsel %vm451, %v444, 0
    %455 = vmatprep.subr.bf16.mxu0 0
    %456 = vmatpush1.bf16.msra.mxu0 %v453
    %457 = vmatprep.subr.bf16.mxu0 0
    %458 = vmatpush1.bf16.msra.mxu0 0
    %459 = vmatprep.subr.bf16.mxu0 0
    %460 = vmatpush1.bf16.msra.mxu0 0
    %461 = vmatprep.subr.bf16.mxu0 0
    %462 = vmatpush1.bf16.msra.mxu0 0
    %463 = vmatprep.subr.bf16.mxu0 0
    %464 = vmatpush1.bf16.msra.mxu0 0
    %465 = vmatprep.subr.bf16.mxu0 0
    %466 = vmatpush1.bf16.msra.mxu0 0
    %467 = vmatprep.subr.bf16.mxu0 0
    %468 = vmatpush1.bf16.msra.mxu0 0
    %469 = vmatprep.subr.bf16.mxu0 0
    %470 = vmatpush1.bf16.msra.mxu0 0
    %471 = vmatprep.subr.bf16.mxu0 0
    %472 = vmatpush1.bf16.msra.mxu0 0
    %473 = vmatprep.subr.bf16.mxu0 0
    %474 = vmatpush1.bf16.msra.mxu0 0
    %475 = vmatprep.subr.bf16.mxu0 0
    %476 = vmatpush1.bf16.msra.mxu0 0
    %477 = vmatprep.subr.bf16.mxu0 0
    %478 = vmatpush1.bf16.msra.mxu0 0
    %479 = vmatprep.subr.bf16.mxu0 0
    %480 = vmatpush1.bf16.msra.mxu0 0
    %481 = vmatprep.subr.bf16.mxu0 0
    %482 = vmatpush1.bf16.msra.mxu0 0
    %483 = vmatprep.subr.bf16.mxu0 0
    %484 = vmatpush1.bf16.msra.mxu0 0
    %485 = vmatprep.subr.bf16.mxu0 0
    %486 = vmatpush1.bf16.msra.mxu0 0
    %487 = vmatprep.mubr.bf16.mxu0 0
    %488 = vmatmul.mubr.bf16.gmra.mrb[0].mxu0 %v449
    %v489 = vpop.f32.mrb[0].mxu0
    %v490 = vadd.f32 0.0, %v489
    %v491 = vpop.f32.mrb[0].mxu0
    %v492 = vpop.f32.mrb[0].mxu0
    %v493 = vpop.f32.mrb[0].mxu0
    %494 = vdwg.mxu0
    %v496 = vsel %vm421, %v447, 0
    %v499 = vsel %vm451, %v445, 0
    %501 = vmatprep.subr.bf16.mxu0 0
    %502 = vmatpush1.bf16.msra.mxu0 %v499
    %503 = vmatprep.subr.bf16.mxu0 0
    %504 = vmatpush1.bf16.msra.mxu0 0
    %505 = vmatprep.subr.bf16.mxu0 0
    %506 = vmatpush1.bf16.msra.mxu0 0
    %507 = vmatprep.subr.bf16.mxu0 0
    %508 = vmatpush1.bf16.msra.mxu0 0
    %509 = vmatprep.subr.bf16.mxu0 0
    %510 = vmatpush1.bf16.msra.mxu0 0
    %511 = vmatprep.subr.bf16.mxu0 0
    %512 = vmatpush1.bf16.msra.mxu0 0
    %513 = vmatprep.subr.bf16.mxu0 0
    %514 = vmatpush1.bf16.msra.mxu0 0
    %515 = vmatprep.subr.bf16.mxu0 0
    %516 = vmatpush1.bf16.msra.mxu0 0
    %517 = vmatprep.subr.bf16.mxu0 0
    %518 = vmatpush1.bf16.msra.mxu0 0
    %519 = vmatprep.subr.bf16.mxu0 0
    %520 = vmatpush1.bf16.msra.mxu0 0
    %521 = vmatprep.subr.bf16.mxu0 0
    %522 = vmatpush1.bf16.msra.mxu0 0
    %523 = vmatprep.subr.bf16.mxu0 0
    %524 = vmatpush1.bf16.msra.mxu0 0
    %525 = vmatprep.subr.bf16.mxu0 0
    %526 = vmatpush1.bf16.msra.mxu0 0
    %527 = vmatprep.subr.bf16.mxu0 0
    %528 = vmatpush1.bf16.msra.mxu0 0
    %529 = vmatprep.subr.bf16.mxu0 0
    %530 = vmatpush1.bf16.msra.mxu0 0
    %531 = vmatprep.subr.bf16.mxu0 0
    %532 = vmatpush1.bf16.msra.mxu0 0
    %533 = vmatprep.mubr.bf16.mxu0 0
    %534 = vmatmul.mubr.bf16.gmra.mrb[0].mxu0 %v496
    %v535 = vpop.f32.mrb[0].mxu0
    %v536 = vadd.f32 0.0, %v535
    %v537 = vpop.f32.mrb[0].mxu0
    %v538 = vpop.f32.mrb[0].mxu0
    %v539 = vpop.f32.mrb[0].mxu0
    %540 = vdwg.mxu0
    %541 = vst.msk [vmem:[#allocation2] sm:$0xff] %vm325, %v490
    %542 = vst.msk [vmem:[#allocation2 + $0x8] sm:$0xff] %vm325, %v536
    %544 = vrot.lane.b32.xlu0 %v314, 112
    %v545 = vpop.permute.xlu0 %544
    %546 = vrot.lane.b32.xlu0 %v316, 48
    %v547 = vpop.permute.xlu0 %546
    %v549 = vsel %vm325, %v545, 0
    %v552 = vsel %vm325, %v547, 0
    %554 = vmatprep.subr.bf16.mxu0 0
    %555 = vmatpush1.bf16.xpose.msra.mxu0 %v552
    %556 = vmatprep.subr.bf16.mxu0 0
    %557 = vmatpush1.bf16.xpose.msra.mxu0 0
    %558 = vmatprep.subr.bf16.mxu0 0
    %559 = vmatpush1.bf16.xpose.msra.mxu0 0
    %560 = vmatprep.subr.bf16.mxu0 0
    %561 = vmatpush1.bf16.xpose.msra.mxu0 0
    %562 = vmatprep.subr.bf16.mxu0 0
    %563 = vmatpush1.bf16.xpose.msra.mxu0 0
    %564 = vmatprep.subr.bf16.mxu0 0
    %565 = vmatpush1.bf16.xpose.msra.mxu0 0
    %566 = vmatprep.subr.bf16.mxu0 0
    %567 = vmatpush1.bf16.xpose.msra.mxu0 0
    %568 = vmatprep.subr.bf16.mxu0 0
    %569 = vmatpush1.bf16.xpose.msra.mxu0 0
    %570 = vmatprep.subr.bf16.mxu0 0
    %571 = vmatpush1.bf16.xpose.msra.mxu0 0
    %572 = vmatprep.subr.bf16.mxu0 0
    %573 = vmatpush1.bf16.xpose.msra.mxu0 0
    %574 = vmatprep.subr.bf16.mxu0 0
    %575 = vmatpush1.bf16.xpose.msra.mxu0 0
    %576 = vmatprep.subr.bf16.mxu0 0
    %577 = vmatpush1.bf16.xpose.msra.mxu0 0
    %578 = vmatprep.subr.bf16.mxu0 0
    %579 = vmatpush1.bf16.xpose.msra.mxu0 0
    %580 = vmatprep.subr.bf16.mxu0 0
    %581 = vmatpush1.bf16.xpose.msra.mxu0 0
    %582 = vmatprep.subr.bf16.mxu0 0
    %583 = vmatpush1.bf16.xpose.msra.mxu0 0
    %584 = vmatprep.subr.bf16.mxu0 0
    %585 = vmatpush1.bf16.xpose.msra.mxu0 0
    %586 = vmatprep.mubr.bf16.mxu0 0
    %587 = vmatmul.mubr.bf16.gmra.mrb[0].mxu0 %v549
    %v588 = vpop.f32.mrb[0].mxu0
    %v589 = vadd.f32 %v323, %v588
    %v590 = vpop.f32.mrb[0].mxu0
    %v591 = vpop.f32.mrb[0].mxu0
    %v592 = vpop.f32.mrb[0].mxu0
    %593 = vdwg.mxu0
    %595 = vrot.lane.b32.xlu0 %v315, 112
    %v596 = vpop.permute.xlu0 %595
    %597 = vrot.lane.b32.xlu0 %v317, 48
    %v598 = vpop.permute.xlu0 %597
    %v600 = vsel %vm325, %v596, 0
    %v603 = vsel %vm325, %v598, 0
    %605 = vmatprep.subr.bf16.mxu0 0
    %606 = vmatpush1.bf16.xpose.msra.mxu0 %v603
    %607 = vmatprep.subr.bf16.mxu0 0
    %608 = vmatpush1.bf16.xpose.msra.mxu0 0
    %609 = vmatprep.subr.bf16.mxu0 0
    %610 = vmatpush1.bf16.xpose.msra.mxu0 0
    %611 = vmatprep.subr.bf16.mxu0 0
    %612 = vmatpush1.bf16.xpose.msra.mxu0 0
    %613 = vmatprep.subr.bf16.mxu0 0
    %614 = vmatpush1.bf16.xpose.msra.mxu0 0
    %615 = vmatprep.subr.bf16.mxu0 0
    %616 = vmatpush1.bf16.xpose.msra.mxu0 0
    %617 = vmatprep.subr.bf16.mxu0 0
    %618 = vmatpush1.bf16.xpose.msra.mxu0 0
    %619 = vmatprep.subr.bf16.mxu0 0
    %620 = vmatpush1.bf16.xpose.msra.mxu0 0
    %621 = vmatprep.subr.bf16.mxu0 0
    %622 = vmatpush1.bf16.xpose.msra.mxu0 0
    %623 = vmatprep.subr.bf16.mxu0 0
    %624 = vmatpush1.bf16.xpose.msra.mxu0 0
    %625 = vmatprep.subr.bf16.mxu0 0
    %626 = vmatpush1.bf16.xpose.msra.mxu0 0
    %627 = vmatprep.subr.bf16.mxu0 0
    %628 = vmatpush1.bf16.xpose.msra.mxu0 0
    %629 = vmatprep.subr.bf16.mxu0 0
    %630 = vmatpush1.bf16.xpose.msra.mxu0 0
    %631 = vmatprep.subr.bf16.mxu0 0
    %632 = vmatpush1.bf16.xpose.msra.mxu0 0
    %633 = vmatprep.subr.bf16.mxu0 0
    %634 = vmatpush1.bf16.xpose.msra.mxu0 0
    %635 = vmatprep.subr.bf16.mxu0 0
    %636 = vmatpush1.bf16.xpose.msra.mxu0 0
    %637 = vmatprep.mubr.bf16.mxu0 0
    %638 = vmatmul.mubr.bf16.gmra.mrb[0].mxu0 %v600
    %v639 = vpop.f32.mrb[0].mxu0
    %v640 = vadd.f32 %v323, %v639
    %v641 = vpop.f32.mrb[0].mxu0
    %v642 = vpop.f32.mrb[0].mxu0
    %v643 = vpop.f32.mrb[0].mxu0
    %644 = vdwg.mxu0
    %v645 = vsel %vm421, %v589, -inf
    %646 = vmax.xlane.f32.xlu0 %v645
    %v647 = vpop.xlane.xlu0 %646
    %v648 = vsel %vm421, %v640, -inf
    %649 = vmax.xlane.f32.xlu0 %v648
    %v650 = vpop.xlane.xlu0 %649
    %v651 = vsub.f32 %v589, %v647
    %v652 = vsub.f32 %v640, %v650
    %v653 = vmul.f32 %v651, 1.442695
    %v654 = vpow.pop %v653
    %v655 = vmul.f32 %v652, 1.442695
    %v656 = vpow.pop %v655
    %v657 = vsel %vm421, %v654, 0.0
    %658 = vadd.xlane.f32.xlu0 %v657
    %v659 = vpop.xlane.xlu0 %658
    %v660 = vsel %vm421, %v656, 0.0
    %661 = vadd.xlane.f32.xlu0 %v660
    %v662 = vpop.xlane.xlu0 %661
    %v663 = vrcp.pop %v659
    %v664 = vrcp.pop %v662
    %v665 = vmul.f32 %v654, %v663
    %v666 = vmul.f32 %v656, %v664
    %v667 = vpack.c.bf16 %v665, %v665
    %v668 = vpack.c.bf16 %v666, %v666
    %670 = vrot.lane.b32.xlu0 %v444, 112
    %v671 = vpop.permute.xlu0 %670
    %v673 = vsel %vm421, %v667, 0
    %v676 = vsel %vm451, %v671, 0
    %678 = vmatprep.subr.bf16.mxu0 0
    %679 = vmatpush1.bf16.msra.mxu0 %v676
    %680 = vmatprep.subr.bf16.mxu0 0
    %681 = vmatpush1.bf16.msra.mxu0 0
    %682 = vmatprep.subr.bf16.mxu0 0
    %683 = vmatpush1.bf16.msra.mxu0 0
    %684 = vmatprep.subr.bf16.mxu0 0
    %685 = vmatpush1.bf16.msra.mxu0 0
    %686 = vmatprep.subr.bf16.mxu0 0
    %687 = vmatpush1.bf16.msra.mxu0 0
    %688 = vmatprep.subr.bf16.mxu0 0
    %689 = vmatpush1.bf16.msra.mxu0 0
    %690 = vmatprep.subr.bf16.mxu0 0
    %691 = vmatpush1.bf16.msra.mxu0 0
    %692 = vmatprep.subr.bf16.mxu0 0
    %693 = vmatpush1.bf16.msra.mxu0 0
    %694 = vmatprep.subr.bf16.mxu0 0
    %695 = vmatpush1.bf16.msra.mxu0 0
    %696 = vmatprep.subr.bf16.mxu0 0
    %697 = vmatpush1.bf16.msra.mxu0 0
    %698 = vmatprep.subr.bf16.mxu0 0
    %699 = vmatpush1.bf16.msra.mxu0 0
    %700 = vmatprep.subr.bf16.mxu0 0
    %701 = vmatpush1.bf16.msra.mxu0 0
    %702 = vmatprep.subr.bf16.mxu0 0
    %703 = vmatpush1.bf16.msra.mxu0 0
    %704 = vmatprep.subr.bf16.mxu0 0
    %705 = vmatpush1.bf16.msra.mxu0 0
    %706 = vmatprep.subr.bf16.mxu0 0
    %707 = vmatpush1.bf16.msra.mxu0 0
    %708 = vmatprep.subr.bf16.mxu0 0
    %709 = vmatpush1.bf16.msra.mxu0 0
    %710 = vmatprep.mubr.bf16.mxu0 0
    %711 = vmatmul.mubr.bf16.gmra.mrb[0].mxu0 %v673
    %v712 = vpop.f32.mrb[0].mxu0
    %v713 = vadd.f32 0.0, %v712
    %v714 = vpop.f32.mrb[0].mxu0
    %v715 = vpop.f32.mrb[0].mxu0
    %v716 = vpop.f32.mrb[0].mxu0
    %717 = vdwg.mxu0
    %719 = vrot.lane.b32.xlu0 %v445, 112
    %v720 = vpop.permute.xlu0 %719
    %v722 = vsel %vm421, %v668, 0
    %v725 = vsel %vm451, %v720, 0
    %727 = vmatprep.subr.bf16.mxu0 0
    %728 = vmatpush1.bf16.msra.mxu0 %v725
    %729 = vmatprep.subr.bf16.mxu0 0
    %730 = vmatpush1.bf16.msra.mxu0 0
    %731 = vmatprep.subr.bf16.mxu0 0
    %732 = vmatpush1.bf16.msra.mxu0 0
    %733 = vmatprep.subr.bf16.mxu0 0
    %734 = vmatpush1.bf16.msra.mxu0 0
    %735 = vmatprep.subr.bf16.mxu0 0
    %736 = vmatpush1.bf16.msra.mxu0 0
    %737 = vmatprep.subr.bf16.mxu0 0
    %738 = vmatpush1.bf16.msra.mxu0 0
    %739 = vmatprep.subr.bf16.mxu0 0
    %740 = vmatpush1.bf16.msra.mxu0 0
    %741 = vmatprep.subr.bf16.mxu0 0
    %742 = vmatpush1.bf16.msra.mxu0 0
    %743 = vmatprep.subr.bf16.mxu0 0
    %744 = vmatpush1.bf16.msra.mxu0 0
    %745 = vmatprep.subr.bf16.mxu0 0
    %746 = vmatpush1.bf16.msra.mxu0 0
    %747 = vmatprep.subr.bf16.mxu0 0
    %748 = vmatpush1.bf16.msra.mxu0 0
    %749 = vmatprep.subr.bf16.mxu0 0
    %750 = vmatpush1.bf16.msra.mxu0 0
    %751 = vmatprep.subr.bf16.mxu0 0
    %752 = vmatpush1.bf16.msra.mxu0 0
    %753 = vmatprep.subr.bf16.mxu0 0
    %754 = vmatpush1.bf16.msra.mxu0 0
    %755 = vmatprep.subr.bf16.mxu0 0
    %756 = vmatpush1.bf16.msra.mxu0 0
    %757 = vmatprep.subr.bf16.mxu0 0
    %758 = vmatpush1.bf16.msra.mxu0 0
    %759 = vmatprep.mubr.bf16.mxu0 0
    %760 = vmatmul.mubr.bf16.gmra.mrb[0].mxu0 %v722
    %v761 = vpop.f32.mrb[0].mxu0
    %v762 = vadd.f32 0.0, %v761
    %v763 = vpop.f32.mrb[0].mxu0
    %v764 = vpop.f32.mrb[0].mxu0
    %v765 = vpop.f32.mrb[0].mxu0
    %766 = vdwg.mxu0
    %769 = vrot.lane.b32.xlu0 %v713, 16
    %v770 = vpop.permute.xlu0 %769
    %771 = vrot.lane.b32.xlu0 %v762, 16
    %v772 = vpop.permute.xlu0 %771
    %vm775 = vcmask 261248
    %776 = vst.msk [vmem:[#allocation2] sm:$0xff] %vm775, %v770
    %777 = vst.msk [vmem:[#allocation2 + $0x8] sm:$0xff] %vm775, %v772
    %778 = vrot.lane.b32.xlu0 %v314, 96
    %v779 = vpop.permute.xlu0 %778
    %780 = vrot.lane.b32.xlu0 %v316, 32
    %v781 = vpop.permute.xlu0 %780
    %v783 = vsel %vm325, %v779, 0
    %v786 = vsel %vm325, %v781, 0
    %788 = vmatprep.subr.bf16.mxu0 0
    %789 = vmatpush1.bf16.xpose.msra.mxu0 %v786
    %790 = vmatprep.subr.bf16.mxu0 0
    %791 = vmatpush1.bf16.xpose.msra.mxu0 0
    %792 = vmatprep.subr.bf16.mxu0 0
    %793 = vmatpush1.bf16.xpose.msra.mxu0 0
    %794 = vmatprep.subr.bf16.mxu0 0
    %795 = vmatpush1.bf16.xpose.msra.mxu0 0
    %796 = vmatprep.subr.bf16.mxu0 0
    %797 = vmatpush1.bf16.xpose.msra.mxu0 0
    %798 = vmatprep.subr.bf16.mxu0 0
    %799 = vmatpush1.bf16.xpose.msra.mxu0 0
    %800 = vmatprep.subr.bf16.mxu0 0
    %801 = vmatpush1.bf16.xpose.msra.mxu0 0
    %802 = vmatprep.subr.bf16.mxu0 0
    %803 = vmatpush1.bf16.xpose.msra.mxu0 0
    %804 = vmatprep.subr.bf16.mxu0 0
    %805 = vmatpush1.bf16.xpose.msra.mxu0 0
    %806 = vmatprep.subr.bf16.mxu0 0
    %807 = vmatpush1.bf16.xpose.msra.mxu0 0
    %808 = vmatprep.subr.bf16.mxu0 0
    %809 = vmatpush1.bf16.xpose.msra.mxu0 0
    %810 = vmatprep.subr.bf16.mxu0 0
    %811 = vmatpush1.bf16.xpose.msra.mxu0 0
    %812 = vmatprep.subr.bf16.mxu0 0
    %813 = vmatpush1.bf16.xpose.msra.mxu0 0
    %814 = vmatprep.subr.bf16.mxu0 0
    %815 = vmatpush1.bf16.xpose.msra.mxu0 0
    %816 = vmatprep.subr.bf16.mxu0 0
    %817 = vmatpush1.bf16.xpose.msra.mxu0 0
    %818 = vmatprep.subr.bf16.mxu0 0
    %819 = vmatpush1.bf16.xpose.msra.mxu0 0
    %820 = vmatprep.mubr.bf16.mxu0 0
    %821 = vmatmul.mubr.bf16.gmra.mrb[0].mxu0 %v783
    %v822 = vpop.f32.mrb[0].mxu0
    %v823 = vadd.f32 %v323, %v822
    %v824 = vpop.f32.mrb[0].mxu0
    %v825 = vpop.f32.mrb[0].mxu0
    %v826 = vpop.f32.mrb[0].mxu0
    %827 = vdwg.mxu0
    %828 = vrot.lane.b32.xlu0 %v315, 96
    %v829 = vpop.permute.xlu0 %828
    %830 = vrot.lane.b32.xlu0 %v317, 32
    %v831 = vpop.permute.xlu0 %830
    %v833 = vsel %vm325, %v829, 0
    %v836 = vsel %vm325, %v831, 0
    %838 = vmatprep.subr.bf16.mxu0 0
    %839 = vmatpush1.bf16.xpose.msra.mxu0 %v836
    %840 = vmatprep.subr.bf16.mxu0 0
    %841 = vmatpush1.bf16.xpose.msra.mxu0 0
    %842 = vmatprep.subr.bf16.mxu0 0
    %843 = vmatpush1.bf16.xpose.msra.mxu0 0
    %844 = vmatprep.subr.bf16.mxu0 0
    %845 = vmatpush1.bf16.xpose.msra.mxu0 0
    %846 = vmatprep.subr.bf16.mxu0 0
    %847 = vmatpush1.bf16.xpose.msra.mxu0 0
    %848 = vmatprep.subr.bf16.mxu0 0
    %849 = vmatpush1.bf16.xpose.msra.mxu0 0
    %850 = vmatprep.subr.bf16.mxu0 0
    %851 = vmatpush1.bf16.xpose.msra.mxu0 0
    %852 = vmatprep.subr.bf16.mxu0 0
    %853 = vmatpush1.bf16.xpose.msra.mxu0 0
    %854 = vmatprep.subr.bf16.mxu0 0
    %855 = vmatpush1.bf16.xpose.msra.mxu0 0
    %856 = vmatprep.subr.bf16.mxu0 0
    %857 = vmatpush1.bf16.xpose.msra.mxu0 0
    %858 = vmatprep.subr.bf16.mxu0 0
    %859 = vmatpush1.bf16.xpose.msra.mxu0 0
    %860 = vmatprep.subr.bf16.mxu0 0
    %861 = vmatpush1.bf16.xpose.msra.mxu0 0
    %862 = vmatprep.subr.bf16.mxu0 0
    %863 = vmatpush1.bf16.xpose.msra.mxu0 0
    %864 = vmatprep.subr.bf16.mxu0 0
    %865 = vmatpush1.bf16.xpose.msra.mxu0 0
    %866 = vmatprep.subr.bf16.mxu0 0
    %867 = vmatpush1.bf16.xpose.msra.mxu0 0
    %868 = vmatprep.subr.bf16.mxu0 0
    %869 = vmatpush1.bf16.xpose.msra.mxu0 0
    %870 = vmatprep.mubr.bf16.mxu0 0
    %871 = vmatmul.mubr.bf16.gmra.mrb[0].mxu0 %v833
    %v872 = vpop.f32.mrb[0].mxu0
    %v873 = vadd.f32 %v323, %v872
    %v874 = vpop.f32.mrb[0].mxu0
    %v875 = vpop.f32.mrb[0].mxu0
    %v876 = vpop.f32.mrb[0].mxu0
    %877 = vdwg.mxu0
    %v878 = vsel %vm421, %v823, -inf
    %879 = vmax.xlane.f32.xlu0 %v878
    %v880 = vpop.xlane.xlu0 %879
    %v881 = vsel %vm421, %v873, -inf
    %882 = vmax.xlane.f32.xlu0 %v881
    %v883 = vpop.xlane.xlu0 %882
    %v884 = vsub.f32 %v823, %v880
    %v885 = vsub.f32 %v873, %v883
    %v886 = vmul.f32 %v884, 1.442695
    %v887 = vpow.pop %v886
    %v888 = vmul.f32 %v885, 1.442695
    %v889 = vpow.pop %v888
    %v890 = vsel %vm421, %v887, 0.0
    %891 = vadd.xlane.f32.xlu0 %v890
    %v892 = vpop.xlane.xlu0 %891
    %v893 = vsel %vm421, %v889, 0.0
    %894 = vadd.xlane.f32.xlu0 %v893
    %v895 = vpop.xlane.xlu0 %894
    %v896 = vrcp.pop %v892
    %v897 = vrcp.pop %v895
    %v898 = vmul.f32 %v887, %v896
    %v899 = vmul.f32 %v889, %v897
    %v900 = vpack.c.bf16 %v898, %v898
    %v901 = vpack.c.bf16 %v899, %v899
    %902 = vrot.lane.b32.xlu0 %v444, 96
    %v903 = vpop.permute.xlu0 %902
    %v905 = vsel %vm421, %v900, 0
    %v908 = vsel %vm451, %v903, 0
    %910 = vmatprep.subr.bf16.mxu0 0
    %911 = vmatpush1.bf16.msra.mxu0 %v908
    %912 = vmatprep.subr.bf16.mxu0 0
    %913 = vmatpush1.bf16.msra.mxu0 0
    %914 = vmatprep.subr.bf16.mxu0 0
    %915 = vmatpush1.bf16.msra.mxu0 0
    %916 = vmatprep.subr.bf16.mxu0 0
    %917 = vmatpush1.bf16.msra.mxu0 0
    %918 = vmatprep.subr.bf16.mxu0 0
    %919 = vmatpush1.bf16.msra.mxu0 0
    %920 = vmatprep.subr.bf16.mxu0 0
    %921 = vmatpush1.bf16.msra.mxu0 0
    %922 = vmatprep.subr.bf16.mxu0 0
    %923 = vmatpush1.bf16.msra.mxu0 0
    %924 = vmatprep.subr.bf16.mxu0 0
    %925 = vmatpush1.bf16.msra.mxu0 0
    %926 = vmatprep.subr.bf16.mxu0 0
    %927 = vmatpush1.bf16.msra.mxu0 0
    %928 = vmatprep.subr.bf16.mxu0 0
    %929 = vmatpush1.bf16.msra.mxu0 0
    %930 = vmatprep.subr.bf16.mxu0 0
    %931 = vmatpush1.bf16.msra.mxu0 0
    %932 = vmatprep.subr.bf16.mxu0 0
    %933 = vmatpush1.bf16.msra.mxu0 0
    %934 = vmatprep.subr.bf16.mxu0 0
    %935 = vmatpush1.bf16.msra.mxu0 0
    %936 = vmatprep.subr.bf16.mxu0 0
    %937 = vmatpush1.bf16.msra.mxu0 0
    %938 = vmatprep.subr.bf16.mxu0 0
    %939 = vmatpush1.bf16.msra.mxu0 0
    %940 = vmatprep.subr.bf16.mxu0 0
    %941 = vmatpush1.bf16.msra.mxu0 0
    %942 = vmatprep.mubr.bf16.mxu0 0
    %943 = vmatmul.mubr.bf16.gmra.mrb[0].mxu0 %v905
    %v944 = vpop.f32.mrb[0].mxu0
    %v945 = vadd.f32 0.0, %v944
    %v946 = vpop.f32.mrb[0].mxu0
    %v947 = vpop.f32.mrb[0].mxu0
    %v948 = vpop.f32.mrb[0].mxu0
    %949 = vdwg.mxu0
    %950 = vrot.lane.b32.xlu0 %v445, 96
    %v951 = vpop.permute.xlu0 %950
    %v953 = vsel %vm421, %v901, 0
    %v956 = vsel %vm451, %v951, 0
    %958 = vmatprep.subr.bf16.mxu0 0
    %959 = vmatpush1.bf16.msra.mxu0 %v956
    %960 = vmatprep.subr.bf16.mxu0 0
    %961 = vmatpush1.bf16.msra.mxu0 0
    %962 = vmatprep.subr.bf16.mxu0 0
    %963 = vmatpush1.bf16.msra.mxu0 0
    %964 = vmatprep.subr.bf16.mxu0 0
    %965 = vmatpush1.bf16.msra.mxu0 0
    %966 = vmatprep.subr.bf16.mxu0 0
    %967 = vmatpush1.bf16.msra.mxu0 0
    %968 = vmatprep.subr.bf16.mxu0 0
    %969 = vmatpush1.bf16.msra.mxu0 0
    %970 = vmatprep.subr.bf16.mxu0 0
    %971 = vmatpush1.bf16.msra.mxu0 0
    %972 = vmatprep.subr.bf16.mxu0 0
    %973 = vmatpush1.bf16.msra.mxu0 0
    %974 = vmatprep.subr.bf16.mxu0 0
    %975 = vmatpush1.bf16.msra.mxu0 0
    %976 = vmatprep.subr.bf16.mxu0 0
    %977 = vmatpush1.bf16.msra.mxu0 0
    %978 = vmatprep.subr.bf16.mxu0 0
    %979 = vmatpush1.bf16.msra.mxu0 0
    %980 = vmatprep.subr.bf16.mxu0 0
    %981 = vmatpush1.bf16.msra.mxu0 0
    %982 = vmatprep.subr.bf16.mxu0 0
    %983 = vmatpush1.bf16.msra.mxu0 0
    %984 = vmatprep.subr.bf16.mxu0 0
    %985 = vmatpush1.bf16.msra.mxu0 0
    %986 = vmatprep.subr.bf16.mxu0 0
    %987 = vmatpush1.bf16.msra.mxu0 0
    %988 = vmatprep.subr.bf16.mxu0 0
    %989 = vmatpush1.bf16.msra.mxu0 0
    %990 = vmatprep.mubr.bf16.mxu0 0
    %991 = vmatmul.mubr.bf16.gmra.mrb[0].mxu0 %v953
    %v992 = vpop.f32.mrb[0].mxu0
    %v993 = vadd.f32 0.0, %v992
    %v994 = vpop.f32.mrb[0].mxu0
    %v995 = vpop.f32.mrb[0].mxu0
    %v996 = vpop.f32.mrb[0].mxu0
    %997 = vdwg.mxu0
    %1000 = vrot.lane.b32.xlu0 %v945, 32
    %v1001 = vpop.permute.xlu0 %1000
    %1002 = vrot.lane.b32.xlu0 %v993, 32
    %v1003 = vpop.permute.xlu0 %1002
    %vm1006 = vcmask 392448
    %1007 = vst.msk [vmem:[#allocation2] sm:$0xff] %vm1006, %v1001
    %1008 = vst.msk [vmem:[#allocation2 + $0x8] sm:$0xff] %vm1006, %v1003
    %1009 = vrot.lane.b32.xlu0 %v314, 80
    %v1010 = vpop.permute.xlu0 %1009
    %1011 = vrot.lane.b32.xlu0 %v316, 16
    %v1012 = vpop.permute.xlu0 %1011
    %v1014 = vsel %vm325, %v1010, 0
    %v1017 = vsel %vm325, %v1012, 0
    %1019 = vmatprep.subr.bf16.mxu0 0
    %1020 = vmatpush1.bf16.xpose.msra.mxu0 %v1017
    %1021 = vmatprep.subr.bf16.mxu0 0
    %1022 = vmatpush1.bf16.xpose.msra.mxu0 0
    %1023 = vmatprep.subr.bf16.mxu0 0
    %1024 = vmatpush1.bf16.xpose.msra.mxu0 0
    %1025 = vmatprep.subr.bf16.mxu0 0
    %1026 = vmatpush1.bf16.xpose.msra.mxu0 0
    %1027 = vmatprep.subr.bf16.mxu0 0
    %1028 = vmatpush1.bf16.xpose.msra.mxu0 0
    %1029 = vmatprep.subr.bf16.mxu0 0
    %1030 = vmatpush1.bf16.xpose.msra.mxu0 0
    %1031 = vmatprep.subr.bf16.mxu0 0
    %1032 = vmatpush1.bf16.xpose.msra.mxu0 0
    %1033 = vmatprep.subr.bf16.mxu0 0
    %1034 = vmatpush1.bf16.xpose.msra.mxu0 0
    %1035 = vmatprep.subr.bf16.mxu0 0
    %1036 = vmatpush1.bf16.xpose.msra.mxu0 0
    %1037 = vmatprep.subr.bf16.mxu0 0
    %1038 = vmatpush1.bf16.xpose.msra.mxu0 0
    %1039 = vmatprep.subr.bf16.mxu0 0
    %1040 = vmatpush1.bf16.xpose.msra.mxu0 0
    %1041 = vmatprep.subr.bf16.mxu0 0
    %1042 = vmatpush1.bf16.xpose.msra.mxu0 0
    %1043 = vmatprep.subr.bf16.mxu0 0
    %1044 = vmatpush1.bf16.xpose.msra.mxu0 0
    %1045 = vmatprep.subr.bf16.mxu0 0
    %1046 = vmatpush1.bf16.xpose.msra.mxu0 0
    %1047 = vmatprep.subr.bf16.mxu0 0
    %1048 = vmatpush1.bf16.xpose.msra.mxu0 0
    %1049 = vmatprep.subr.bf16.mxu0 0
    %1050 = vmatpush1.bf16.xpose.msra.mxu0 0
    %1051 = vmatprep.mubr.bf16.mxu0 0
    %1052 = vmatmul.mubr.bf16.gmra.mrb[0].mxu0 %v1014
    %v1053 = vpop.f32.mrb[0].mxu0
    %v1054 = vadd.f32 %v323, %v1053
    %v1055 = vpop.f32.mrb[0].mxu0
    %v1056 = vpop.f32.mrb[0].mxu0
    %v1057 = vpop.f32.mrb[0].mxu0
    %1058 = vdwg.mxu0
    %1059 = vrot.lane.b32.xlu0 %v315, 80
    %v1060 = vpop.permute.xlu0 %1059
    %1061 = vrot.lane.b32.xlu0 %v317, 16
    %v1062 = vpop.permute.xlu0 %1061
    %v1064 = vsel %vm325, %v1060, 0
    %v1067 = vsel %vm325, %v1062, 0
    %1069 = vmatprep.subr.bf16.mxu0 0
    %1070 = vmatpush1.bf16.xpose.msra.mxu0 %v1067
    %1071 = vmatprep.subr.bf16.mxu0 0
    %1072 = vmatpush1.bf16.xpose.msra.mxu0 0
    %1073 = vmatprep.subr.bf16.mxu0 0
    %1074 = vmatpush1.bf16.xpose.msra.mxu0 0
    %1075 = vmatprep.subr.bf16.mxu0 0
    %1076 = vmatpush1.bf16.xpose.msra.mxu0 0
    %1077 = vmatprep.subr.bf16.mxu0 0
    %1078 = vmatpush1.bf16.xpose.msra.mxu0 0
    %1079 = vmatprep.subr.bf16.mxu0 0
    %1080 = vmatpush1.bf16.xpose.msra.mxu0 0
    %1081 = vmatprep.subr.bf16.mxu0 0
    %1082 = vmatpush1.bf16.xpose.msra.mxu0 0
    %1083 = vmatprep.subr.bf16.mxu0 0
    %1084 = vmatpush1.bf16.xpose.msra.mxu0 0
    %1085 = vmatprep.subr.bf16.mxu0 0
    %1086 = vmatpush1.bf16.xpose.msra.mxu0 0
    %1087 = vmatprep.subr.bf16.mxu0 0
    %1088 = vmatpush1.bf16.xpose.msra.mxu0 0
    %1089 = vmatprep.subr.bf16.mxu0 0
    %1090 = vmatpush1.bf16.xpose.msra.mxu0 0
    %1091 = vmatprep.subr.bf16.mxu0 0
    %1092 = vmatpush1.bf16.xpose.msra.mxu0 0
    %1093 = vmatprep.subr.bf16.mxu0 0
    %1094 = vmatpush1.bf16.xpose.msra.mxu0 0
    %1095 = vmatprep.subr.bf16.mxu0 0
    %1096 = vmatpush1.bf16.xpose.msra.mxu0 0
    %1097 = vmatprep.subr.bf16.mxu0 0
    %1098 = vmatpush1.bf16.xpose.msra.mxu0 0
    %1099 = vmatprep.subr.bf16.mxu0 0
    %1100 = vmatpush1.bf16.xpose.msra.mxu0 0
    %1101 = vmatprep.mubr.bf16.mxu0 0
    %1102 = vmatmul.mubr.bf16.gmra.mrb[0].mxu0 %v1064
    %v1103 = vpop.f32.mrb[0].mxu0
    %v1104 = vadd.f32 %v323, %v1103
    %v1105 = vpop.f32.mrb[0].mxu0
    %v1106 = vpop.f32.mrb[0].mxu0
    %v1107 = vpop.f32.mrb[0].mxu0
    %1108 = vdwg.mxu0
    %v1109 = vsel %vm421, %v1054, -inf
    %1110 = vmax.xlane.f32.xlu0 %v1109
    %v1111 = vpop.xlane.xlu0 %1110
    %v1112 = vsel %vm421, %v1104, -inf
    %1113 = vmax.xlane.f32.xlu0 %v1112
    %v1114 = vpop.xlane.xlu0 %1113
    %v1115 = vsub.f32 %v1054, %v1111
    %v1116 = vsub.f32 %v1104, %v1114
    %v1117 = vmul.f32 %v1115, 1.442695
    %v1118 = vpow.pop %v1117
    %v1119 = vmul.f32 %v1116, 1.442695
    %v1120 = vpow.pop %v1119
    %v1121 = vsel %vm421, %v1118, 0.0
    %1122 = vadd.xlane.f32.xlu0 %v1121
    %v1123 = vpop.xlane.xlu0 %1122
    %v1124 = vsel %vm421, %v1120, 0.0
    %1125 = vadd.xlane.f32.xlu0 %v1124
    %v1126 = vpop.xlane.xlu0 %1125
    %v1127 = vrcp.pop %v1123
    %v1128 = vrcp.pop %v1126
    %v1129 = vmul.f32 %v1118, %v1127
    %v1130 = vmul.f32 %v1120, %v1128
    %v1131 = vpack.c.bf16 %v1129, %v1129
    %v1132 = vpack.c.bf16 %v1130, %v1130
    %1133 = vrot.lane.b32.xlu0 %v444, 80
    %v1134 = vpop.permute.xlu0 %1133
    %v1136 = vsel %vm421, %v1131, 0
    %v1139 = vsel %vm451, %v1134, 0
    %1141 = vmatprep.subr.bf16.mxu0 0
    %1142 = vmatpush1.bf16.msra.mxu0 %v1139
    %1143 = vmatprep.subr.bf16.mxu0 0
    %1144 = vmatpush1.bf16.msra.mxu0 0
    %1145 = vmatprep.subr.bf16.mxu0 0
    %1146 = vmatpush1.bf16.msra.mxu0 0
    %1147 = vmatprep.subr.bf16.mxu0 0
    %1148 = vmatpush1.bf16.msra.mxu0 0
    %1149 = vmatprep.subr.bf16.mxu0 0
    %1150 = vmatpush1.bf16.msra.mxu0 0
    %1151 = vmatprep.subr.bf16.mxu0 0
    %1152 = vmatpush1.bf16.msra.mxu0 0
    %1153 = vmatprep.subr.bf16.mxu0 0
    %1154 = vmatpush1.bf16.msra.mxu0 0
    %1155 = vmatprep.subr.bf16.mxu0 0
    %1156 = vmatpush1.bf16.msra.mxu0 0
    %1157 = vmatprep.subr.bf16.mxu0 0
    %1158 = vmatpush1.bf16.msra.mxu0 0
    %1159 = vmatprep.subr.bf16.mxu0 0
    %1160 = vmatpush1.bf16.msra.mxu0 0
    %1161 = vmatprep.subr.bf16.mxu0 0
    %1162 = vmatpush1.bf16.msra.mxu0 0
    %1163 = vmatprep.subr.bf16.mxu0 0
    %1164 = vmatpush1.bf16.msra.mxu0 0
    %1165 = vmatprep.subr.bf16.mxu0 0
    %1166 = vmatpush1.bf16.msra.mxu0 0
    %1167 = vmatprep.subr.bf16.mxu0 0
    %1168 = vmatpush1.bf16.msra.mxu0 0
    %1169 = vmatprep.subr.bf16.mxu0 0
    %1170 = vmatpush1.bf16.msra.mxu0 0
    %1171 = vmatprep.subr.bf16.mxu0 0
    %1172 = vmatpush1.bf16.msra.mxu0 0
    %1173 = vmatprep.mubr.bf16.mxu0 0
    %1174 = vmatmul.mubr.bf16.gmra.mrb[0].mxu0 %v1136
    %v1175 = vpop.f32.mrb[0].mxu0
    %v1176 = vadd.f32 0.0, %v1175
    %v1177 = vpop.f32.mrb[0].mxu0
    %v1178 = vpop.f32.mrb[0].mxu0
    %v1179 = vpop.f32.mrb[0].mxu0
    %1180 = vdwg.mxu0
    %1181 = vrot.lane.b32.xlu0 %v445, 80
    %v1182 = vpop.permute.xlu0 %1181
    %v1184 = vsel %vm421, %v1132, 0
    %v1187 = vsel %vm451, %v1182, 0
    %1189 = vmatprep.subr.bf16.mxu0 0
    %1190 = vmatpush1.bf16.msra.mxu0 %v1187
    %1191 = vmatprep.subr.bf16.mxu0 0
    %1192 = vmatpush1.bf16.msra.mxu0 0
    %1193 = vmatprep.subr.bf16.mxu0 0
    %1194 = vmatpush1.bf16.msra.mxu0 0
    %1195 = vmatprep.subr.bf16.mxu0 0
    %1196 = vmatpush1.bf16.msra.mxu0 0
    %1197 = vmatprep.subr.bf16.mxu0 0
    %1198 = vmatpush1.bf16.msra.mxu0 0
    %1199 = vmatprep.subr.bf16.mxu0 0
    %1200 = vmatpush1.bf16.msra.mxu0 0
    %1201 = vmatprep.subr.bf16.mxu0 0
    %1202 = vmatpush1.bf16.msra.mxu0 0
    %1203 = vmatprep.subr.bf16.mxu0 0
    %1204 = vmatpush1.bf16.msra.mxu0 0
    %1205 = vmatprep.subr.bf16.mxu0 0
    %1206 = vmatpush1.bf16.msra.mxu0 0
    %1207 = vmatprep.subr.bf16.mxu0 0
    %1208 = vmatpush1.bf16.msra.mxu0 0
    %1209 = vmatprep.subr.bf16.mxu0 0
    %1210 = vmatpush1.bf16.msra.mxu0 0
    %1211 = vmatprep.subr.bf16.mxu0 0
    %1212 = vmatpush1.bf16.msra.mxu0 0
    %1213 = vmatprep.subr.bf16.mxu0 0
    %1214 = vmatpush1.bf16.msra.mxu0 0
    %1215 = vmatprep.subr.bf16.mxu0 0
    %1216 = vmatpush1.bf16.msra.mxu0 0
    %1217 = vmatprep.subr.bf16.mxu0 0
    %1218 = vmatpush1.bf16.msra.mxu0 0
    %1219 = vmatprep.subr.bf16.mxu0 0
    %1220 = vmatpush1.bf16.msra.mxu0 0
    %1221 = vmatprep.mubr.bf16.mxu0 0
    %1222 = vmatmul.mubr.bf16.gmra.mrb[0].mxu0 %v1184
    %v1223 = vpop.f32.mrb[0].mxu0
    %v1224 = vadd.f32 0.0, %v1223
    %v1225 = vpop.f32.mrb[0].mxu0
    %v1226 = vpop.f32.mrb[0].mxu0
    %v1227 = vpop.f32.mrb[0].mxu0
    %1228 = vdwg.mxu0
    %1231 = vrot.lane.b32.xlu0 %v1176, 48
    %v1232 = vpop.permute.xlu0 %1231
    %1233 = vrot.lane.b32.xlu0 %v1224, 48
    %v1234 = vpop.permute.xlu0 %1233
    %vm1237 = vcmask 523648
    %1238 = vst.msk [vmem:[#allocation2] sm:$0xff] %vm1237, %v1232
    %1239 = vst.msk [vmem:[#allocation2 + $0x8] sm:$0xff] %vm1237, %v1234
    %v1240 = vld [vmem:[#allocation2] sm:$0xff]
    %v1241 = vld [vmem:[#allocation2 + $0x8] sm:$0xff]
    %v1242 = vpack.c.bf16 %v1241, %v1240
    %v1243 = vld [vmem:[#allocation6] sm:$0xf]
    %v1244 = vld [vmem:[#allocation6 + $0x4] sm:$0xf]
    %v1245 = vld [vmem:[#allocation6 + $0x8] sm:$0xf]
    %v1246 = vld [vmem:[#allocation6 + $0xc] sm:$0xf]
    %v1247 = vld [vmem:[#allocation6 + $0x10] sm:$0xf]
    %v1248 = vld [vmem:[#allocation6 + $0x14] sm:$0xf]
    %v1249 = vld [vmem:[#allocation6 + $0x18] sm:$0xf]
    %v1250 = vld [vmem:[#allocation6 + $0x1c] sm:$0xf]
    %v1259 = vunpack.c.l.b16 %v1243
    %v1260 = vunpack.c.l.b16 %v1244
    %v1261 = vunpack.c.l.b16 %v1245
    %v1262 = vunpack.c.l.b16 %v1246
    %v1263 = vunpack.c.l.b16 %v1247
    %v1264 = vunpack.c.l.b16 %v1248
    %v1265 = vunpack.c.l.b16 %v1249
    %v1266 = vunpack.c.l.b16 %v1250
    %v1267 = vpack.c.b16 %v1260, %v1259
    %v1268 = vpack.c.b16 %v1262, %v1261
    %v1269 = vpack.c.b16 %v1264, %v1263
    %v1270 = vpack.c.b16 %v1266, %v1265
    %v1276 = vsel %vm87, %v1242, 0
    %1278 = vmatprep.subr.bf16.mxu0 0
    %1279 = vmatpush1.bf16.msra.mxu0 %v1267
    %1280 = vmatprep.subr.bf16.mxu0 0
    %1281 = vmatpush1.bf16.msra.mxu0 %v1268
    %1282 = vmatprep.subr.bf16.mxu0 0
    %1283 = vmatpush1.bf16.msra.mxu0 %v1269
    %1284 = vmatprep.subr.bf16.mxu0 0
    %1285 = vmatpush1.bf16.msra.mxu0 %v1270
    %1286 = vmatprep.subr.bf16.mxu0 0
    %1287 = vmatpush1.bf16.msra.mxu0 0
    %1288 = vmatprep.subr.bf16.mxu0 0
    %1289 = vmatpush1.bf16.msra.mxu0 0
    %1290 = vmatprep.subr.bf16.mxu0 0
    %1291 = vmatpush1.bf16.msra.mxu0 0
    %1292 = vmatprep.subr.bf16.mxu0 0
    %1293 = vmatpush1.bf16.msra.mxu0 0
    %1294 = vmatprep.subr.bf16.mxu0 0
    %1295 = vmatpush1.bf16.msra.mxu0 0
    %1296 = vmatprep.subr.bf16.mxu0 0
    %1297 = vmatpush1.bf16.msra.mxu0 0
    %1298 = vmatprep.subr.bf16.mxu0 0
    %1299 = vmatpush1.bf16.msra.mxu0 0
    %1300 = vmatprep.subr.bf16.mxu0 0
    %1301 = vmatpush1.bf16.msra.mxu0 0
    %1302 = vmatprep.subr.bf16.mxu0 0
    %1303 = vmatpush1.bf16.msra.mxu0 0
    %1304 = vmatprep.subr.bf16.mxu0 0
    %1305 = vmatpush1.bf16.msra.mxu0 0
    %1306 = vmatprep.subr.bf16.mxu0 0
    %1307 = vmatpush1.bf16.msra.mxu0 0
    %1308 = vmatprep.subr.bf16.mxu0 0
    %1309 = vmatpush1.bf16.msra.mxu0 0
    %1310 = vmatprep.mubr.bf16.mxu0 0
    %1311 = vmatmul.mubr.bf16.gmra.mrb[0].mxu0 %v1276
    %v1312 = vpop.f32.mrb[0].mxu0
    %v1313 = vadd.f32 0.0, %v1312
    %v1314 = vpop.f32.mrb[0].mxu0
    %v1315 = vpop.f32.mrb[0].mxu0
    %v1316 = vadd.f32 0.0, %v1315
    %v1317 = vpop.f32.mrb[0].mxu0
    %1318 = vdwg.mxu0
    %v1319 = vadd.f32 %v80, %v1313
    %v1320 = vadd.f32 %v81, %v1316
    %v1321 = vmul.f32 %v1319, %v1319
    %v1322 = vmul.f32 %v1320, %v1320
    %v1323 = vsel %vm87, %v1321, 0.0
    %1324 = vadd.xlane.f32.xlu0 %v1323
    %v1325 = vpop.xlane.xlu0 %1324
    %v1326 = vsel %vm87, %v1322, 0.0
    %1327 = vadd.xlane.f32.xlu0 %v1326
    %v1328 = vpop.xlane.xlu0 %1327
    %v1329 = vmul.f32 %v1325, %v94
    %v1330 = vmul.f32 %v1328, %v94
    %v1331 = vadd.f32 %v1329, 1e-06
    %v1332 = vadd.f32 %v1330, 1e-06
    %v1333 = vrsqrt.pop %v1331
    %v1334 = vrsqrt.pop %v1332
    %v1335 = vmul.f32 %v1319, %v1333
    %v1336 = vmul.f32 %v1320, %v1334
    %v1337 = vlaneseq
    %v1338 = vshrl.u32 %v1337, 7
    %v1339 = vsub.s32 1, %v1338
    %v1340 = vrot.slane %v103, %v1339
    %v1341 = vmul.f32 %v1335, %v1340
    %v1342 = vmul.f32 %v1336, %v1340
    %v1343 = vpack.c.bf16 %v1342, %v1341
    %v1344 = vld [vmem:[#allocation8] sm:$0xff]
    %v1345 = vld [vmem:[#allocation8 + $0x8] sm:$0xff]
    %v1346 = vld [vmem:[#allocation8 + $0x10] sm:$0xff]
    %v1347 = vld [vmem:[#allocation8 + $0x18] sm:$0xff]
    %v1348 = vld [vmem:[#allocation8 + $0x20] sm:$0xff]
    %v1349 = vld [vmem:[#allocation8 + $0x28] sm:$0xff]
    %v1350 = vld [vmem:[#allocation8 + $0x30] sm:$0xff]
    %v1351 = vld [vmem:[#allocation8 + $0x38] sm:$0xff]
    %v1360 = vunpack.c.l.b16 %v1344
    %v1361 = vunpack.c.h.b16 %v1344
    %v1362 = vunpack.c.l.b16 %v1345
    %v1363 = vunpack.c.h.b16 %v1345
    %v1364 = vunpack.c.l.b16 %v1346
    %v1365 = vunpack.c.h.b16 %v1346
    %v1366 = vunpack.c.l.b16 %v1347
    %v1367 = vunpack.c.h.b16 %v1347
    %v1368 = vunpack.c.l.b16 %v1348
    %v1369 = vunpack.c.h.b16 %v1348
    %v1370 = vunpack.c.l.b16 %v1349
    %v1371 = vunpack.c.h.b16 %v1349
    %v1372 = vunpack.c.l.b16 %v1350
    %v1373 = vunpack.c.h.b16 %v1350
    %v1374 = vunpack.c.l.b16 %v1351
    %v1375 = vunpack.c.h.b16 %v1351
    %v1376 = vpack.c.b16 %v1362, %v1360
    %v1377 = vpack.c.b16 %v1363, %v1361
    %v1378 = vpack.c.b16 %v1366, %v1364
    %v1379 = vpack.c.b16 %v1367, %v1365
    %v1380 = vpack.c.b16 %v1370, %v1368
    %v1381 = vpack.c.b16 %v1371, %v1369
    %v1382 = vpack.c.b16 %v1374, %v1372
    %v1383 = vpack.c.b16 %v1375, %v1373
    %v1393 = vsel %vm87, %v1343, 0
    %1395 = vmatprep.subr.bf16.mxu0 %v1377
    %1396 = vmatpush1.bf16.msra.mxu0 %v1376
    %1397 = vmatprep.subr.bf16.mxu0 %v1379
    %1398 = vmatpush1.bf16.msra.mxu0 %v1378
    %1399 = vmatprep.subr.bf16.mxu0 %v1381
    %1400 = vmatpush1.bf16.msra.mxu0 %v1380
    %1401 = vmatprep.subr.bf16.mxu0 %v1383
    %1402 = vmatpush1.bf16.msra.mxu0 %v1382
    %1403 = vmatprep.subr.bf16.mxu0 0
    %1404 = vmatpush1.bf16.msra.mxu0 0
    %1405 = vmatprep.subr.bf16.mxu0 0
    %1406 = vmatpush1.bf16.msra.mxu0 0
    %1407 = vmatprep.subr.bf16.mxu0 0
    %1408 = vmatpush1.bf16.msra.mxu0 0
    %1409 = vmatprep.subr.bf16.mxu0 0
    %1410 = vmatpush1.bf16.msra.mxu0 0
    %1411 = vmatprep.subr.bf16.mxu0 0
    %1412 = vmatpush1.bf16.msra.mxu0 0
    %1413 = vmatprep.subr.bf16.mxu0 0
    %1414 = vmatpush1.bf16.msra.mxu0 0
    %1415 = vmatprep.subr.bf16.mxu0 0
    %1416 = vmatpush1.bf16.msra.mxu0 0
    %1417 = vmatprep.subr.bf16.mxu0 0
    %1418 = vmatpush1.bf16.msra.mxu0 0
    %1419 = vmatprep.subr.bf16.mxu0 0
    %1420 = vmatpush1.bf16.msra.mxu0 0
    %1421 = vmatprep.subr.bf16.mxu0 0
    %1422 = vmatpush1.bf16.msra.mxu0 0
    %1423 = vmatprep.subr.bf16.mxu0 0
    %1424 = vmatpush1.bf16.msra.mxu0 0
    %1425 = vmatprep.subr.bf16.mxu0 0
    %1426 = vmatpush1.bf16.msra.mxu0 0
    %1427 = vmatprep.mubr.bf16.mxu0 0
    %1428 = vmatmul.mubr.bf16.gmra.mrb[0].mxu0 %v1393
    %v1429 = vpop.f32.mrb[0].mxu0
    %v1430 = vadd.f32 0.0, %v1429
    %v1431 = vpop.f32.mrb[0].mxu0
    %v1432 = vadd.f32 0.0, %v1431
    %v1433 = vpop.f32.mrb[0].mxu0
    %v1434 = vadd.f32 0.0, %v1433
    %v1435 = vpop.f32.mrb[0].mxu0
    %v1436 = vadd.f32 0.0, %v1435
    %1437 = vdwg.mxu0
    %v1438 = vmul.f32 %v1430, 0.5
    %v1439 = vmul.f32 %v1434, 0.5
    %v1440 = vmul.f32 %v1430, 0.044715
    %v1441 = vmul.f32 %v1434, 0.044715
    %v1442 = vmul.f32 %v1440, %v1430
    %v1443 = vmul.f32 %v1441, %v1434
    %v1444 = vmul.f32 %v1442, %v1430
    %v1445 = vmul.f32 %v1443, %v1434
    %v1446 = vadd.f32 %v1430, %v1444
    %v1447 = vadd.f32 %v1434, %v1445
    %v1448 = vmul.f32 %v1446, 0.7978846
    %v1449 = vmul.f32 %v1447, 0.7978846
    %v1450 = vtanh.pop %v1448
    %v1451 = vtanh.pop %v1449
    %v1452 = vadd.f32 %v1450, 1.0
    %v1453 = vadd.f32 %v1451, 1.0
    %v1454 = vmul.f32 %v1438, %v1452
    %v1455 = vmul.f32 %v1439, %v1453
    %v1456 = vmul.f32 %v1454, %v1432
    %v1457 = vmul.f32 %v1455, %v1436
    %v1458 = vpack.c.bf16 %v1457, %v1456
    %v1459 = vld [vmem:[%s4] sm:$0xf]
    %v1460 = vld [vmem:[%s4 + $0x4] sm:$0xf]
    %v1461 = vld [vmem:[%s4 + $0x8] sm:$0xf]
    %v1462 = vld [vmem:[%s4 + $0xc] sm:$0xf]
    %v1463 = vld [vmem:[%s4 + $0x10] sm:$0xf]
    %v1464 = vld [vmem:[%s4 + $0x14] sm:$0xf]
    %v1465 = vld [vmem:[%s4 + $0x18] sm:$0xf]
    %v1466 = vld [vmem:[%s4 + $0x1c] sm:$0xf]
    %v1467 = vld [vmem:[%s4 + $0x20] sm:$0xf]
    %v1468 = vld [vmem:[%s4 + $0x24] sm:$0xf]
    %v1469 = vld [vmem:[%s4 + $0x28] sm:$0xf]
    %v1470 = vld [vmem:[%s4 + $0x2c] sm:$0xf]
    %v1471 = vld [vmem:[%s4 + $0x30] sm:$0xf]
    %v1472 = vld [vmem:[%s4 + $0x34] sm:$0xf]
    %v1473 = vld [vmem:[%s4 + $0x38] sm:$0xf]
    %v1474 = vld [vmem:[%s4 + $0x3c] sm:$0xf]
    %v1491 = vunpack.c.l.b16 %v1459
    %v1492 = vunpack.c.l.b16 %v1460
    %v1493 = vunpack.c.l.b16 %v1461
    %v1494 = vunpack.c.l.b16 %v1462
    %v1495 = vunpack.c.l.b16 %v1463
    %v1496 = vunpack.c.l.b16 %v1464
    %v1497 = vunpack.c.l.b16 %v1465
    %v1498 = vunpack.c.l.b16 %v1466
    %v1499 = vunpack.c.l.b16 %v1467
    %v1500 = vunpack.c.l.b16 %v1468
    %v1501 = vunpack.c.l.b16 %v1469
    %v1502 = vunpack.c.l.b16 %v1470
    %v1503 = vunpack.c.l.b16 %v1471
    %v1504 = vunpack.c.l.b16 %v1472
    %v1505 = vunpack.c.l.b16 %v1473
    %v1506 = vunpack.c.l.b16 %v1474
    %v1507 = vpack.c.b16 %v1492, %v1491
    %v1508 = vpack.c.b16 %v1494, %v1493
    %v1509 = vpack.c.b16 %v1496, %v1495
    %v1510 = vpack.c.b16 %v1498, %v1497
    %v1511 = vpack.c.b16 %v1500, %v1499
    %v1512 = vpack.c.b16 %v1502, %v1501
    %v1513 = vpack.c.b16 %v1504, %v1503
    %v1514 = vpack.c.b16 %v1506, %v1505
    %1523 = vmatprep.subr.bf16.mxu0 0
    %1524 = vmatpush1.bf16.msra.mxu0 %v1507
    %1525 = vmatprep.subr.bf16.mxu0 0
    %1526 = vmatpush1.bf16.msra.mxu0 %v1508
    %1527 = vmatprep.subr.bf16.mxu0 0
    %1528 = vmatpush1.bf16.msra.mxu0 %v1509
    %1529 = vmatprep.subr.bf16.mxu0 0
    %1530 = vmatpush1.bf16.msra.mxu0 %v1510
    %1531 = vmatprep.subr.bf16.mxu0 0
    %1532 = vmatpush1.bf16.msra.mxu0 %v1511
    %1533 = vmatprep.subr.bf16.mxu0 0
    %1534 = vmatpush1.bf16.msra.mxu0 %v1512
    %1535 = vmatprep.subr.bf16.mxu0 0
    %1536 = vmatpush1.bf16.msra.mxu0 %v1513
    %1537 = vmatprep.subr.bf16.mxu0 0
    %1538 = vmatpush1.bf16.msra.mxu0 %v1514
    %1539 = vmatprep.subr.bf16.mxu0 0
    %1540 = vmatpush1.bf16.msra.mxu0 0
    %1541 = vmatprep.subr.bf16.mxu0 0
    %1542 = vmatpush1.bf16.msra.mxu0 0
    %1543 = vmatprep.subr.bf16.mxu0 0
    %1544 = vmatpush1.bf16.msra.mxu0 0
    %1545 = vmatprep.subr.bf16.mxu0 0
    %1546 = vmatpush1.bf16.msra.mxu0 0
    %1547 = vmatprep.subr.bf16.mxu0 0
    %1548 = vmatpush1.bf16.msra.mxu0 0
    %1549 = vmatprep.subr.bf16.mxu0 0
    %1550 = vmatpush1.bf16.msra.mxu0 0
    %1551 = vmatprep.subr.bf16.mxu0 0
    %1552 = vmatpush1.bf16.msra.mxu0 0
    %1553 = vmatprep.subr.bf16.mxu0 0
    %1554 = vmatpush1.bf16.msra.mxu0 0
    %1555 = vmatprep.mubr.bf16.mxu0 0
    %1556 = vmatmul.mubr.bf16.gmra.mrb[0].mxu0 %v1458
    %v1557 = vpop.f32.mrb[0].mxu0
    %v1558 = vadd.f32 0.0, %v1557
    %v1559 = vpop.f32.mrb[0].mxu0
    %v1560 = vpop.f32.mrb[0].mxu0
    %v1561 = vadd.f32 0.0, %v1560
    %v1562 = vpop.f32.mrb[0].mxu0
    %1563 = vdwg.mxu0
    %v1564 = vadd.f32 %v1319, %v1558
    %v1565 = vadd.f32 %v1320, %v1561
    %1566 = vst.msk [vmem:[#allocation11] sm:$0xff] %vm87, %v1564
    %1567 = vst.msk [vmem:[#allocation11 + $0x8] sm:$0xff] %vm87, %v1565
    // Predicated region
    $region42: #{gemma_decoder_layer.1} parent=1 // pred_check
      _
    $region43: #{gemma_decoder_layer.1} parent=1 // pred_check_branch
      %1569 = sbr.rel (0) target = $region45
    $region44: #{gemma_decoder_layer.1} parent=1 // pred_region
      %s1571 = ssub.s32 256, 256
      %1572 = vsyncadd [#allocation5], %s1571
      %s1573 = sshll.u32 [#allocation11], 4
      %s1574 = int_to_ptr.vmem [resolvable:$true] %s1573
      %1579 = dma.vmem_to_hbm [thread:$0]  %s1574, 256, %s6, [#allocation5], 128, 128, 8
    $region45: #{gemma_decoder_layer.1} parent=1 // pred_fallthru
      _
    // Predicated region
    $region46: #{gemma_decoder_layer.1} parent=1 // pred_check
      _
    $region47: #{gemma_decoder_layer.1} parent=1 // pred_check_branch
      %1581 = sbr.rel (0) target = $region49
    $region48: #{gemma_decoder_layer.1} parent=1 // pred_region
      %1582 = dma.done [#allocation5], 256
    $region49: #{gemma_decoder_layer.1} parent=1 // pred_fallthru
      _
    %1583 = vsyncpa [#allocation4], 1
    %1584 = vsyncpa [#allocation7], 1
    %1585 = vsyncpa [#allocation10], 1
    %1586 = vsyncpa [#allocation5], 1

</llo_original>
